<compile_context>
chip_gen: v5e
topology: v5e:2x2
jax: 0.10.0
libtpu: 0.0.40
codegen_flags: <defaults>
</compile_context>

<pallas_src>
import functools

import jax
import jax.numpy as jnp
from jax import lax
from jax.experimental import pallas as pl
from jax.experimental.pallas import tpu as pltpu


# ----------------------------------------------------------------------------- kernel ----
def gru_decoder_kernel(emb_ref,     # (T_S, T_B, H)   mxu dtype  (time-major emb stream)
                       gi_th_ref,   # (T_B, 3H)       f32        (relu(thought)@W_i_th + b_ih)
                       w_ie_ref,    # (H, 3H)         mxu dtype  (emb-side fused gate weights)
                       w_h_ref,     # (H, 3H)         mxu dtype  (hidden-side fused gate weights)
                       b_h_ref,     # (1, 3H)         f32
                       wout_ref,    # (H, Vp)         mxu dtype
                       bout_ref,    # (1, Vp)         f32 (zero-padded; masked in kernel)
                       logp_ref,    # out: (T_B, T_S, Vp)  logp dtype  (batch-major, lane-dense)
                       hN_ref,      # out: (T_B, H)        f32
                       h_carry,     # scratch: (T_B, H)        f32  (GRU state across seq tiles)
                       gi_scr,      # scratch: (T_S, T_B, 3H)  f32  (hoisted input-gate acts)
                       hs_scr,      # scratch: (T_S, T_B, H)   f32  (per-tile hidden states)
                       *, vocab, seq_len, v_chunk, mask_time, unroll):
    s = pl.program_id(1)                      # sequence-tile index (arbitrary / sequential)
    T_S, T_B, H = emb_ref.shape
    Vp = wout_ref.shape[1]
    n_chunks = Vp // v_chunk

    # Reset the recurrent state at the start of each batch-tile's sequence sweep.
    @pl.when(s == 0)
    def _():
        h_carry[...] = jnp.zeros_like(h_carry)

    # ---- Phase 1: hoisted, fused input-side gate projection (one big MXU matmul) --------
    # relu(concat(emb, thought)) @ W_i  ==  relu(emb) @ W_i[:H]  +  relu(thought) @ W_i[H:]
    # (the thought term + b_ih is precomputed per batch row in gi_th_ref).
    x = jnp.maximum(emb_ref[...], 0).reshape(T_S * T_B, H)
    gi = jnp.dot(x, w_ie_ref[...], preferred_element_type=jnp.float32)      # (T_S*T_B, 3H)
    gi_scr[...] = gi.reshape(T_S, T_B, 3 * H) + gi_th_ref[...][None]

    w_h = w_h_ref[...]
    b_h = b_h_ref[...]

    # ---- Phase 2: serial recurrence (one (T_B,H)x(H,3H) dot + gate math per step) --------
    def step(t, h):
        gh = jnp.dot(h.astype(w_h.dtype), w_h,
                     preferred_element_type=jnp.float32) + b_h              # (T_B, 3H)
        g = gi_scr[t]                                                        # (T_B, 3H)
        r = jax.nn.sigmoid(g[:, 0 * H:1 * H] + gh[:, 0 * H:1 * H])
        z = jax.nn.sigmoid(g[:, 1 * H:2 * H] + gh[:, 1 * H:2 * H])
        n = jnp.tanh(g[:, 2 * H:3 * H] + r * gh[:, 2 * H:3 * H])
        h_new = (1.0 - z) * n + z * h
        if mask_time:  # static: only traced when S was padded up to a tile multiple
            h_new = jnp.where(s * T_S + t < seq_len, h_new, h)
        hs_scr[t] = h_new
        return h_new

    h_final = lax.fori_loop(0, T_S, step, h_carry[...], unroll=unroll)
    h_carry[...] = h_final

    # Only the last sequence tile's state is the module's returned hidden state.
    @pl.when(s == pl.num_programs(1) - 1)
    def _():
        hN_ref[...] = h_final

    # ---- Phase 3: batched output projection + chunked ONLINE log-softmax -----------------
    # Reorder the (small, H-wide) hidden states to batch-major in VMEM so the (large, Vp-wide)
    # logp store is batch-major and lane-dense with no wrapper-side transpose.
    hs = jnp.swapaxes(hs_scr[...], 0, 1).reshape(T_B * T_S, H).astype(wout_ref.dtype)
    m = jnp.full((T_B * T_S, 1), -1e30, jnp.float32)
    l = jnp.zeros((T_B * T_S, 1), jnp.float32)
    for c in range(n_chunks):                                   # static chunk loop
        lo = c * v_chunk
        logits = jnp.dot(hs, wout_ref[:, lo:lo + v_chunk],
                         preferred_element_type=jnp.float32) + bout_ref[:, lo:lo + v_chunk]
        if lo + v_chunk > vocab:  # static: mask padded vocab lanes (no -1e30 bias sentinel)
            col = lo + lax.broadcasted_iota(jnp.int32, logits.shape, 1)
            logits = jnp.where(col < vocab, logits, -1e30)
        # Stage raw logits in the output tile; keep running (max, sum-exp) per row.
        logp_ref[:, :, lo:lo + v_chunk] = (
            logits.reshape(T_B, T_S, v_chunk).astype(logp_ref.dtype))
        m_new = jnp.maximum(m, jnp.max(logits, axis=-1, keepdims=True))
        l = l * jnp.exp(m - m_new) + jnp.sum(jnp.exp(logits - m_new), axis=-1, keepdims=True)
        m = m_new
    lse = (m + jnp.log(l)).reshape(T_B, T_S, 1)
    for c in range(n_chunks):                                   # second pass: normalize
        lo = c * v_chunk
        logp_ref[:, :, lo:lo + v_chunk] = (
            logp_ref[:, :, lo:lo + v_chunk].astype(jnp.float32) - lse).astype(logp_ref.dtype)


# ----------------------------------------------------------------------------- wrapper ---
def _round_up(n, m):
    return -(-n // m) * m


def _vmem_capacity_bytes():
    try:
        cap = int(getattr(pltpu.get_tpu_info(), "vmem_capacity_bytes", 0) or 0)
        if cap > 0:
            return cap
    except Exception:
        pass
    return 64 << 20  # conservative (v7x-sized) fallback


def gru_decoder_forward(target_seqs, thought, params, *,
                        max_batch_tile=128, max_seq_tile=16, vocab_chunk=2048,
                        mxu_dtype=jnp.bfloat16, logp_dtype=jnp.float32):
    """target_seqs: (B, S) int32; thought: (1, B, H) f32. Returns (logp (B,S,V), hidden (1,B,H))."""
    emb_table = params["embedding"]                            # (V, H)
    B, S = target_seqs.shape
    V, H = emb_table.shape

    # --- vocab padding / chunking (lane-dense; padded cols masked in-kernel) ---
    Vp128 = _round_up(V, 128)
    v_chunk = min(max(128, _round_up(vocab_chunk, 128)), Vp128)
    Vp = _round_up(Vp128, v_chunk)

    # --- batch tiling: big tiles, but >=2 parallel blocks when batch allows (v7x) ---
    Bp0 = _round_up(max(B, 8), 8)
    T_B = min(_round_up(max(max_batch_tile, 8), 8), Bp0)
    if Bp0 == T_B and Bp0 >= 16:
        T_B = _round_up(Bp0 // 2, 8)

    # --- sequence tiling: prefer multiple-of-8 tile; pad S instead of degrading ---
    if S <= max_seq_tile:
        T_S = S
    else:
        T_S = max(8, (max_seq_tile // 8) * 8)
        for cand in range(T_S, 7, -8):        # prefer an exact multiple-of-8 divisor
            if S % cand == 0:
                T_S = cand
                break

    # --- generation-aware VMEM budget; shrink tiles if the estimate does not fit ---
    cap = _vmem_capacity_bytes()
    budget = int(cap * 0.75)
    mxu_bytes = jnp.dtype(mxu_dtype).itemsize
    out_bytes = jnp.dtype(logp_dtype).itemsize

    def est(tb, ts):
        return (2 * ts * tb * H * mxu_bytes            # emb tiles (double-buffered)
                + 2 * tb * 3 * H * 4                   # gi_thought tiles
                + 2 * ts * tb * Vp * out_bytes         # logp tiles (double-buffered)
                + 2 * tb * H * 4                       # hN tile
                + 2 * H * 3 * H * mxu_bytes            # w_ie + w_h (single copy, whole-VMEM)
                + H * Vp * mxu_bytes                   # wout (single copy, whole-VMEM)
                + 8 * (3 * H + Vp) * 4                 # biases (sublane-padded)
                + (tb * H + ts * tb * 3 * H + ts * tb * H) * 4      # scratches
                + 2 * ts * tb * max(3 * H, v_chunk) * 4)            # live intermediates

    while est(T_B, T_S) > budget and T_S > 8:
        T_S = max(8, ((T_S // 2) + 7) // 8 * 8)
    while est(T_B, T_S) > budget and T_B > 8:
        T_B = max(8, _round_up(T_B // 2, 8))

    Sp = _round_up(S, T_S)
    Bp = _round_up(B, T_B)
    mask_time = Sp != S
    grid = (Bp // T_B, Sp // T_S)                       # (parallel batch, arbitrary seq)
    vmem_limit = int(min(cap, max(32 << 20, est(T_B, T_S) * 3 // 2 + (8 << 20))))

    # --- XLA glue: time-major embedding gather (only the tiny index array is transposed) ---
    emb = emb_table[target_seqs.T].astype(mxu_dtype)            # (S, B, H) time-major
    emb = jnp.pad(emb, ((0, Sp - S), (0, Bp - B), (0, 0)))      # padded rows/steps are zeros

    # Thought half of the fused input projection, computed once per batch row (f32).
    th = jnp.maximum(thought[0].astype(jnp.float32), 0.0)       # relu(thought)  (B, H)
    w_ih = params["w_ih"].astype(jnp.float32)                   # (3H, 2H), gate order r|z|n
    gi_th = th @ w_ih[:, H:].T + params["b_ih"].astype(jnp.float32)   # (B, 3H)
    gi_th = jnp.pad(gi_th, ((0, Bp - B), (0, 0)))               # padded batch rows: garbage-but-
                                                                # finite, sliced off below.
    # Fused / transposed weights (x @ W layout; PyTorch gate order preserved).
    w_ie = w_ih[:, :H].T.astype(mxu_dtype)                      # (H, 3H)
    w_h = params["w_hh"].T.astype(mxu_dtype)                    # (H, 3H)
    b_h = params["b_hh"][None].astype(jnp.float32)              # (1, 3H)
    wout = jnp.pad(params["w_out"].T.astype(jnp.float32),
                   ((0, 0), (0, Vp - V))).astype(mxu_dtype)     # (H, Vp)
    bout = jnp.pad(params["b_out"][None].astype(jnp.float32),
                   ((0, 0), (0, Vp - V)))                       # (1, Vp), zero pad (masked)

    kernel = functools.partial(
        gru_decoder_kernel,
        vocab=V, seq_len=S, v_chunk=v_chunk, mask_time=mask_time,
        unroll=(True if T_S <= 8 else 4))

    vmem_ws = pl.BlockSpec(memory_space=pltpu.MemorySpace.VMEM)   # whole-array, single-buffered

    logp_pad, h_final = pl.pallas_call(
        kernel,
        grid=grid,
        in_specs=[
            pl.BlockSpec((T_S, T_B, H), lambda b, s: (s, b, 0)),  # emb stream
            pl.BlockSpec((T_B, 3 * H), lambda b, s: (b, 0)),      # gi_thought (per batch tile)
            vmem_ws,                                              # w_ie
            vmem_ws,                                              # w_h
            vmem_ws,                                              # b_h
            vmem_ws,                                              # wout
            vmem_ws,                                              # bout
        ],
        out_specs=(
            pl.BlockSpec((T_B, T_S, Vp), lambda b, s: (b, s, 0)),  # logp, batch-major stream
            pl.BlockSpec((T_B, H), lambda b, s: (b, 0)),           # final hidden
        ),
        out_shape=(
            jax.ShapeDtypeStruct((Bp, Sp, Vp), logp_dtype),
            jax.ShapeDtypeStruct((Bp, H), jnp.float32),
        ),
        scratch_shapes=[
            pltpu.VMEM((T_B, H), jnp.float32),            # recurrent state carry
            pltpu.VMEM((T_S, T_B, 3 * H), jnp.float32),   # hoisted input-gate activations
            pltpu.VMEM((T_S, T_B, H), jnp.float32),       # per-tile hidden states
        ],
        compiler_params=pltpu.CompilerParams(
            dimension_semantics=("parallel", "arbitrary"),
            vmem_limit_bytes=vmem_limit),
    )(emb, gi_th, w_ie, w_h, b_h, wout, bout)

    logp = logp_pad[:B, :S, :V]                       # (B, S, V) batch-first, pads sliced off
    hidden = h_final[:B][None]                        # (num_layers=1, B, H)
    return logp, hidden


# ---------------------------------------------------------------------------- reference --
def make_params(key, vocab_size, hidden_size):
    """Deterministic synthetic parameters matching nn.Embedding / nn.GRU / nn.Linear shapes."""
    H, V = hidden_size, vocab_size
    ks = jax.random.split(key, 7)
    scale = 1.0 / jnp.sqrt(H)
    emb = jax.random.normal(ks[0], (V, H), jnp.float32) * 0.1
    # PyTorch GRU: weight_ih_l0 (3H, 2H), weight_hh_l0 (3H, H), gate order [r, z, n].
    w_ih = jax.random.uniform(ks[1], (3 * H, 2 * H), jnp.float32, -scale, scale)
    w_hh = jax.random.uniform(ks[2], (3 * H, H), jnp.float32, -scale, scale)
    b_ih = jax.random.uniform(ks[3], (3 * H,), jnp.float32, -scale, scale)
    b_hh = jax.random.uniform(ks[4], (3 * H,), jnp.float32, -scale, scale)
    w_out = jax.random.uniform(ks[5], (V, H), jnp.float32, -scale, scale)
    b_out = jax.random.uniform(ks[6], (V,), jnp.float32, -scale, scale)
    return dict(embedding=emb, w_ih=w_ih, w_hh=w_hh, b_ih=b_ih, b_hh=b_hh,
                w_out=w_out, b_out=b_out)


def reference_forward(target_seqs, thought, params):
    """Pure-JAX reference reproducing the PyTorch forward (num_layers=1)."""
    H = params["embedding"].shape[1]
    emb = params["embedding"][target_seqs]                         # (B, S, H)
    B, S, _ = emb.shape
    th = jnp.broadcast_to(thought[0][:, None, :], (B, S, H))
    x = jnp.maximum(jnp.concatenate([emb, th], axis=-1), 0.0)      # (B, S, 2H)

    w_ih, w_hh = params["w_ih"], params["w_hh"]
    b_ih, b_hh = params["b_ih"], params["b_hh"]

    def cell(h, x_t):
        gi = x_t @ w_ih.T + b_ih
        gh = h @ w_hh.T + b_hh
        i_r, i_z, i_n = jnp.split(gi, 3, axis=-1)
        h_r, h_z, h_n = jnp.split(gh, 3, axis=-1)
        r = jax.nn.sigmoid(i_r + h_r)
        z = jax.nn.sigmoid(i_z + h_z)
        n = jnp.tanh(i_n + r * h_n)
        h_new = (1.0 - z) * n + z * h
        return h_new, h_new

    h0 = jnp.zeros((B, H), jnp.float32)
    hF, outs = lax.scan(cell, h0, jnp.transpose(x, (1, 0, 2)))
    outs = jnp.transpose(outs, (1, 0, 2))                          # (B, S, H)
    logits = outs @ params["w_out"].T + params["b_out"]
    logp = jax.nn.log_softmax(logits, axis=-1)
    return logp, hF[None]


# --------------------------------------------------------------------------------- main --
if __name__ == "__main__":
    vocab_size = 64
    hidden_size = 32

    key = jax.random.PRNGKey(0)
    k_tok, k_th, k_par, k_tok2, k_th2 = jax.random.split(key, 5)
    params = make_params(k_par, vocab_size, hidden_size)

    # --- Test 1: batch=2, seq=8, f32 MXU operands: exact structural check --------------
    batch, seq = 2, 8
    target_seqs = jax.random.randint(k_tok, (batch, seq), 0, vocab_size, dtype=jnp.int32)
    thought = jax.random.normal(k_th, (1, batch, hidden_size), jnp.float32)
    logp_ref, hidden_ref = reference_forward(target_seqs, thought, params)

    logp32, hidden32 = gru_decoder_forward(target_seqs, thought, params,
                                           max_seq_tile=8, mxu_dtype=jnp.float32)
    logp32 = jax.block_until_ready(logp32)
    hidden32 = jax.block_until_ready(hidden32)
    assert logp32.shape == (batch, seq, vocab_size)
    assert hidden32.shape == (1, batch, hidden_size)
    assert jnp.allclose(logp32, logp_ref, atol=1e-4, rtol=1e-4)
    assert jnp.allclose(hidden32, hidden_ref, atol=1e-4, rtol=1e-4)

    # --- Test 2: batch=3, seq=13 (exercises batch/seq padding, multi-tile carry, masking) ---
    b2, s2 = 3, 13
    seqs2 = jax.random.randint(k_tok2, (b2, s2), 0, vocab_size, dtype=jnp.int32)
    thought2 = jax.random.normal(k_th2, (1, b2, hidden_size), jnp.float32)
    logp_ref2, hidden_ref2 = reference_forward(seqs2, thought2, params)
    logp2, hidden2 = gru_decoder_forward(seqs2, thought2, params,
                                         max_seq_tile=8, mxu_dtype=jnp.float32)
    logp2 = jax.block_until_ready(logp2)
    hidden2 = jax.block_until_ready(hidden2)
    assert logp2.shape == (b2, s2, vocab_size)
    assert hidden2.shape == (1, b2, hidden_size)
    assert jnp.allclose(logp2, logp_ref2, atol=1e-4, rtol=1e-4)
    assert jnp.allclose(hidden2, hidden_ref2, atol=1e-4, rtol=1e-4)

    # --- Test 3: default bf16 MXU operands (f32 accumulation / gate math): loose tolerance ---
    logp, hidden = gru_decoder_forward(target_seqs, thought, params, max_seq_tile=8)
    logp = jax.block_until_ready(logp)
    hidden = jax.block_until_ready(hidden)
    assert logp.shape == (batch, seq, vocab_size)
    assert hidden.shape == (1, batch, hidden_size)
    assert jnp.allclose(logp, logp_ref, atol=8e-2, rtol=2e-2)
    assert jnp.allclose(hidden, hidden_ref, atol=4e-2, rtol=2e-2)

    print("KERNEL_OK")
</pallas_src>

<mosaic_0001>
module attributes {stable_mosaic.version = 11 : i64} {
  func.func @gru_decoder_kernel(%arg0: i32, %arg1: i32, %arg2: memref<8x8x32xf32, #tpu.memory_space<vmem>>, %arg3: memref<8x96xf32, #tpu.memory_space<vmem>>, %arg4: memref<32x96xf32, #tpu.memory_space<vmem>>, %arg5: memref<32x96xf32, #tpu.memory_space<vmem>>, %arg6: memref<1x96xf32, #tpu.memory_space<vmem>>, %arg7: memref<32x128xf32, #tpu.memory_space<vmem>>, %arg8: memref<1x128xf32, #tpu.memory_space<vmem>>, %arg9: memref<8x8x128xf32, #tpu.memory_space<vmem>>, %arg10: memref<8x32xf32, #tpu.memory_space<vmem>>, %arg11: memref<8x32xf32, #tpu.memory_space<vmem>>, %arg12: memref<8x8x96xf32, #tpu.memory_space<vmem>>, %arg13: memref<8x8x32xf32, #tpu.memory_space<vmem>>) attributes {dimension_semantics = [#tpu.dimension_semantics<parallel>, #tpu.dimension_semantics<arbitrary>], iteration_bounds = array<i64: 1, 1>, scalar_prefetch = 0 : i64, scratch_operands = 3 : i64, tpu.core_type = #tpu.core_type<tc>, window_params = [{transform_indices = @transform_0, window_bounds = array<i64: 8, 8, 32>}, {transform_indices = @transform_1, window_bounds = array<i64: 8, 96>}, {pipeline_mode = #tpu.pipeline_mode<synchronous>, transform_indices = @transform_2, window_bounds = array<i64: 32, 96>}, {pipeline_mode = #tpu.pipeline_mode<synchronous>, transform_indices = @transform_3, window_bounds = array<i64: 32, 96>}, {pipeline_mode = #tpu.pipeline_mode<synchronous>, transform_indices = @transform_4, window_bounds = array<i64: 1, 96>}, {pipeline_mode = #tpu.pipeline_mode<synchronous>, transform_indices = @transform_5, window_bounds = array<i64: 32, 128>}, {pipeline_mode = #tpu.pipeline_mode<synchronous>, transform_indices = @transform_6, window_bounds = array<i64: 1, 128>}, {transform_indices = @transform_7, window_bounds = array<i64: 8, 8, 128>}, {transform_indices = @transform_8, window_bounds = array<i64: 8, 32>}]} {
    %c0_i32 = arith.constant 0 : i32
    %0 = arith.cmpi eq, %arg1, %c0_i32 : i32
    %1 = arith.extui %0 : i1 to i32
    %c0_i32_0 = arith.constant 0 : i32
    %2 = arith.cmpi ne, %1, %c0_i32_0 : i32
    scf.if %2 {
      %cst_109 = arith.constant 0.000000e+00 : f32
      %348 = vector.broadcast %cst_109 : f32 to vector<8x32xf32>
      %c0_110 = arith.constant 0 : index
      %c0_111 = arith.constant 0 : index
      %349 = vector.load %arg11[%c0_110, %c0_111] : memref<8x32xf32, #tpu.memory_space<vmem>>, vector<8x32xf32>
      tpu.vector_store %arg11[%c0_110, %c0_111], %348 {strides = array<i32>} : memref<8x32xf32, #tpu.memory_space<vmem>>, vector<8x32xf32>,
    } else {
    }
    %c0 = arith.constant 0 : index
    %c0_1 = arith.constant 0 : index
    %c0_2 = arith.constant 0 : index
    %3 = vector.load %arg2[%c0, %c0_1, %c0_2] : memref<8x8x32xf32, #tpu.memory_space<vmem>>, vector<8x8x32xf32>
    %cst = arith.constant 0.000000e+00 : f32
    %4 = vector.broadcast %cst : f32 to vector<8x8x32xf32>
    %5 = arith.maximumf %3, %4 : vector<8x8x32xf32>
    %6 = vector.shape_cast %5 : vector<8x8x32xf32> to vector<64x32xf32>
    %c0_3 = arith.constant 0 : index
    %c0_4 = arith.constant 0 : index
    %7 = vector.load %arg4[%c0_3, %c0_4] : memref<32x96xf32, #tpu.memory_space<vmem>>, vector<32x96xf32>
    %cst_5 = arith.constant dense<0.000000e+00> : vector<64x96xf32>
    %8 = tpu.matmul %6, %7, %cst_5 {dimension_numbers = #tpu.dot_dimension_numbers<[1], [0], [0], [1], [0, 0, 1, 1], [], []>} : vector<64x32xf32>, vector<32x96xf32>, vector<64x96xf32> -> vector<64x96xf32>
    %9 = vector.shape_cast %8 : vector<64x96xf32> to vector<8x8x96xf32>
    %c0_6 = arith.constant 0 : index
    %c0_7 = arith.constant 0 : index
    %10 = vector.load %arg3[%c0_6, %c0_7] : memref<8x96xf32, #tpu.memory_space<vmem>>, vector<8x96xf32>
    %11 = vector.shape_cast %10 : vector<8x96xf32> to vector<1x8x96xf32>
    %12 = vector.broadcast %11 : vector<1x8x96xf32> to vector<8x8x96xf32>
    %13 = arith.addf %9, %12 : vector<8x8x96xf32>
    %c0_8 = arith.constant 0 : index
    %c0_9 = arith.constant 0 : index
    %c0_10 = arith.constant 0 : index
    %14 = vector.load %arg12[%c0_8, %c0_9, %c0_10] : memref<8x8x96xf32, #tpu.memory_space<vmem>>, vector<8x8x96xf32>
    tpu.vector_store %arg12[%c0_8, %c0_9, %c0_10], %13 {strides = array<i32>} : memref<8x8x96xf32, #tpu.memory_space<vmem>>, vector<8x8x96xf32>,
    %c0_11 = arith.constant 0 : index
    %c0_12 = arith.constant 0 : index
    %15 = vector.load %arg5[%c0_11, %c0_12] : memref<32x96xf32, #tpu.memory_space<vmem>>, vector<32x96xf32>
    %c0_13 = arith.constant 0 : index
    %c0_14 = arith.constant 0 : index
    %16 = vector.load %arg6[%c0_13, %c0_14] : memref<1x96xf32, #tpu.memory_space<vmem>>, vector<1x96xf32>
    %c0_15 = arith.constant 0 : index
    %c0_16 = arith.constant 0 : index
    %17 = vector.load %arg11[%c0_15, %c0_16] : memref<8x32xf32, #tpu.memory_space<vmem>>, vector<8x32xf32>
    %c0_i32_17 = arith.constant 0 : i32
    %cst_18 = arith.constant dense<0.000000e+00> : vector<8x96xf32>
    %18 = tpu.matmul %17, %15, %cst_18 {dimension_numbers = #tpu.dot_dimension_numbers<[1], [0], [0], [1], [0, 0, 1, 1], [], []>} : vector<8x32xf32>, vector<32x96xf32>, vector<8x96xf32> -> vector<8x96xf32>
    %19 = vector.broadcast %16 : vector<1x96xf32> to vector<8x96xf32>
    %20 = arith.addf %18, %19 : vector<8x96xf32>
    %21 = arith.index_cast %c0_i32_17 : i32 to index
    %c0_19 = arith.constant 0 : index
    %c0_20 = arith.constant 0 : index
    %22 = vector.load %arg12[%21, %c0_19, %c0_20] : memref<8x8x96xf32, #tpu.memory_space<vmem>>, vector<1x8x96xf32>
    %23 = vector.shape_cast %22 : vector<1x8x96xf32> to vector<8x96xf32>
    %24 = vector.extract_strided_slice %23 {offsets = [0, 0], sizes = [8, 32], strides = [1, 1]} : vector<8x96xf32> to vector<8x32xf32>
    %25 = vector.extract_strided_slice %20 {offsets = [0, 0], sizes = [8, 32], strides = [1, 1]} : vector<8x96xf32> to vector<8x32xf32>
    %26 = arith.addf %24, %25 : vector<8x32xf32>
    %27 = arith.negf %26 : vector<8x32xf32>
    %28 = math.exp %27 : vector<8x32xf32>
    %cst_21 = arith.constant 1.000000e+00 : f32
    %29 = vector.broadcast %cst_21 : f32 to vector<8x32xf32>
    %30 = arith.addf %29, %28 : vector<8x32xf32>
    %31 = arith.divf %29, %30 : vector<8x32xf32>
    %32 = vector.extract_strided_slice %23 {offsets = [0, 32], sizes = [8, 32], strides = [1, 1]} : vector<8x96xf32> to vector<8x32xf32>
    %33 = vector.extract_strided_slice %20 {offsets = [0, 32], sizes = [8, 32], strides = [1, 1]} : vector<8x96xf32> to vector<8x32xf32>
    %34 = arith.addf %32, %33 : vector<8x32xf32>
    %35 = arith.negf %34 : vector<8x32xf32>
    %36 = math.exp %35 : vector<8x32xf32>
    %cst_22 = arith.constant 1.000000e+00 : f32
    %37 = vector.broadcast %cst_22 : f32 to vector<8x32xf32>
    %38 = arith.addf %37, %36 : vector<8x32xf32>
    %39 = arith.divf %37, %38 : vector<8x32xf32>
    %40 = vector.extract_strided_slice %23 {offsets = [0, 64], sizes = [8, 32], strides = [1, 1]} : vector<8x96xf32> to vector<8x32xf32>
    %41 = vector.extract_strided_slice %20 {offsets = [0, 64], sizes = [8, 32], strides = [1, 1]} : vector<8x96xf32> to vector<8x32xf32>
    %42 = arith.mulf %31, %41 : vector<8x32xf32>
    %43 = arith.addf %40, %42 : vector<8x32xf32>
    %44 = math.tanh %43 : vector<8x32xf32>
    %cst_23 = arith.constant 1.000000e+00 : f32
    %45 = vector.broadcast %cst_23 : f32 to vector<8x32xf32>
    %46 = arith.subf %45, %39 : vector<8x32xf32>
    %47 = arith.mulf %46, %44 : vector<8x32xf32>
    %48 = arith.mulf %39, %17 : vector<8x32xf32>
    %49 = arith.addf %47, %48 : vector<8x32xf32>
    %50 = arith.index_cast %c0_i32_17 : i32 to index
    %c0_24 = arith.constant 0 : index
    %c0_25 = arith.constant 0 : index
    %51 = vector.load %arg13[%50, %c0_24, %c0_25] : memref<8x8x32xf32, #tpu.memory_space<vmem>>, vector<1x8x32xf32>
    %52 = vector.shape_cast %51 : vector<1x8x32xf32> to vector<8x32xf32>
    %53 = vector.shape_cast %49 : vector<8x32xf32> to vector<1x8x32xf32>
    tpu.vector_store %arg13[%50, %c0_24, %c0_25], %53 {strides = array<i32>} : memref<8x8x32xf32, #tpu.memory_space<vmem>>, vector<1x8x32xf32>,
    %c1_i32 = arith.constant 1 : i32
    %cst_26 = arith.constant dense<0.000000e+00> : vector<8x96xf32>
    %54 = tpu.matmul %49, %15, %cst_26 {dimension_numbers = #tpu.dot_dimension_numbers<[1], [0], [0], [1], [0, 0, 1, 1], [], []>} : vector<8x32xf32>, vector<32x96xf32>, vector<8x96xf32> -> vector<8x96xf32>
    %55 = vector.broadcast %16 : vector<1x96xf32> to vector<8x96xf32>
    %56 = arith.addf %54, %55 : vector<8x96xf32>
    %57 = arith.index_cast %c1_i32 : i32 to index
    %c0_27 = arith.constant 0 : index
    %c0_28 = arith.constant 0 : index
    %58 = vector.load %arg12[%57, %c0_27, %c0_28] : memref<8x8x96xf32, #tpu.memory_space<vmem>>, vector<1x8x96xf32>
    %59 = vector.shape_cast %58 : vector<1x8x96xf32> to vector<8x96xf32>
    %60 = vector.extract_strided_slice %59 {offsets = [0, 0], sizes = [8, 32], strides = [1, 1]} : vector<8x96xf32> to vector<8x32xf32>
    %61 = vector.extract_strided_slice %56 {offsets = [0, 0], sizes = [8, 32], strides = [1, 1]} : vector<8x96xf32> to vector<8x32xf32>
    %62 = arith.addf %60, %61 : vector<8x32xf32>
    %63 = arith.negf %62 : vector<8x32xf32>
    %64 = math.exp %63 : vector<8x32xf32>
    %cst_29 = arith.constant 1.000000e+00 : f32
    %65 = vector.broadcast %cst_29 : f32 to vector<8x32xf32>
    %66 = arith.addf %65, %64 : vector<8x32xf32>
    %67 = arith.divf %65, %66 : vector<8x32xf32>
    %68 = vector.extract_strided_slice %59 {offsets = [0, 32], sizes = [8, 32], strides = [1, 1]} : vector<8x96xf32> to vector<8x32xf32>
    %69 = vector.extract_strided_slice %56 {offsets = [0, 32], sizes = [8, 32], strides = [1, 1]} : vector<8x96xf32> to vector<8x32xf32>
    %70 = arith.addf %68, %69 : vector<8x32xf32>
    %71 = arith.negf %70 : vector<8x32xf32>
    %72 = math.exp %71 : vector<8x32xf32>
    %cst_30 = arith.constant 1.000000e+00 : f32
    %73 = vector.broadcast %cst_30 : f32 to vector<8x32xf32>
    %74 = arith.addf %73, %72 : vector<8x32xf32>
    %75 = arith.divf %73, %74 : vector<8x32xf32>
    %76 = vector.extract_strided_slice %59 {offsets = [0, 64], sizes = [8, 32], strides = [1, 1]} : vector<8x96xf32> to vector<8x32xf32>
    %77 = vector.extract_strided_slice %56 {offsets = [0, 64], sizes = [8, 32], strides = [1, 1]} : vector<8x96xf32> to vector<8x32xf32>
    %78 = arith.mulf %67, %77 : vector<8x32xf32>
    %79 = arith.addf %76, %78 : vector<8x32xf32>
    %80 = math.tanh %79 : vector<8x32xf32>
    %cst_31 = arith.constant 1.000000e+00 : f32
    %81 = vector.broadcast %cst_31 : f32 to vector<8x32xf32>
    %82 = arith.subf %81, %75 : vector<8x32xf32>
    %83 = arith.mulf %82, %80 : vector<8x32xf32>
    %84 = arith.mulf %75, %49 : vector<8x32xf32>
    %85 = arith.addf %83, %84 : vector<8x32xf32>
    %86 = arith.index_cast %c1_i32 : i32 to index
    %c0_32 = arith.constant 0 : index
    %c0_33 = arith.constant 0 : index
    %87 = vector.load %arg13[%86, %c0_32, %c0_33] : memref<8x8x32xf32, #tpu.memory_space<vmem>>, vector<1x8x32xf32>
    %88 = vector.shape_cast %87 : vector<1x8x32xf32> to vector<8x32xf32>
    %89 = vector.shape_cast %85 : vector<8x32xf32> to vector<1x8x32xf32>
    tpu.vector_store %arg13[%86, %c0_32, %c0_33], %89 {strides = array<i32>} : memref<8x8x32xf32, #tpu.memory_space<vmem>>, vector<1x8x32xf32>,
    %c2_i32 = arith.constant 2 : i32
    %cst_34 = arith.constant dense<0.000000e+00> : vector<8x96xf32>
    %90 = tpu.matmul %85, %15, %cst_34 {dimension_numbers = #tpu.dot_dimension_numbers<[1], [0], [0], [1], [0, 0, 1, 1], [], []>} : vector<8x32xf32>, vector<32x96xf32>, vector<8x96xf32> -> vector<8x96xf32>
    %91 = vector.broadcast %16 : vector<1x96xf32> to vector<8x96xf32>
    %92 = arith.addf %90, %91 : vector<8x96xf32>
    %93 = arith.index_cast %c2_i32 : i32 to index
    %c0_35 = arith.constant 0 : index
    %c0_36 = arith.constant 0 : index
    %94 = vector.load %arg12[%93, %c0_35, %c0_36] : memref<8x8x96xf32, #tpu.memory_space<vmem>>, vector<1x8x96xf32>
    %95 = vector.shape_cast %94 : vector<1x8x96xf32> to vector<8x96xf32>
    %96 = vector.extract_strided_slice %95 {offsets = [0, 0], sizes = [8, 32], strides = [1, 1]} : vector<8x96xf32> to vector<8x32xf32>
    %97 = vector.extract_strided_slice %92 {offsets = [0, 0], sizes = [8, 32], strides = [1, 1]} : vector<8x96xf32> to vector<8x32xf32>
    %98 = arith.addf %96, %97 : vector<8x32xf32>
    %99 = arith.negf %98 : vector<8x32xf32>
    %100 = math.exp %99 : vector<8x32xf32>
    %cst_37 = arith.constant 1.000000e+00 : f32
    %101 = vector.broadcast %cst_37 : f32 to vector<8x32xf32>
    %102 = arith.addf %101, %100 : vector<8x32xf32>
    %103 = arith.divf %101, %102 : vector<8x32xf32>
    %104 = vector.extract_strided_slice %95 {offsets = [0, 32], sizes = [8, 32], strides = [1, 1]} : vector<8x96xf32> to vector<8x32xf32>
    %105 = vector.extract_strided_slice %92 {offsets = [0, 32], sizes = [8, 32], strides = [1, 1]} : vector<8x96xf32> to vector<8x32xf32>
    %106 = arith.addf %104, %105 : vector<8x32xf32>
    %107 = arith.negf %106 : vector<8x32xf32>
    %108 = math.exp %107 : vector<8x32xf32>
    %cst_38 = arith.constant 1.000000e+00 : f32
    %109 = vector.broadcast %cst_38 : f32 to vector<8x32xf32>
    %110 = arith.addf %109, %108 : vector<8x32xf32>
    %111 = arith.divf %109, %110 : vector<8x32xf32>
    %112 = vector.extract_strided_slice %95 {offsets = [0, 64], sizes = [8, 32], strides = [1, 1]} : vector<8x96xf32> to vector<8x32xf32>
    %113 = vector.extract_strided_slice %92 {offsets = [0, 64], sizes = [8, 32], strides = [1, 1]} : vector<8x96xf32> to vector<8x32xf32>
    %114 = arith.mulf %103, %113 : vector<8x32xf32>
    %115 = arith.addf %112, %114 : vector<8x32xf32>
    %116 = math.tanh %115 : vector<8x32xf32>
    %cst_39 = arith.constant 1.000000e+00 : f32
    %117 = vector.broadcast %cst_39 : f32 to vector<8x32xf32>
    %118 = arith.subf %117, %111 : vector<8x32xf32>
    %119 = arith.mulf %118, %116 : vector<8x32xf32>
    %120 = arith.mulf %111, %85 : vector<8x32xf32>
    %121 = arith.addf %119, %120 : vector<8x32xf32>
    %122 = arith.index_cast %c2_i32 : i32 to index
    %c0_40 = arith.constant 0 : index
    %c0_41 = arith.constant 0 : index
    %123 = vector.load %arg13[%122, %c0_40, %c0_41] : memref<8x8x32xf32, #tpu.memory_space<vmem>>, vector<1x8x32xf32>
    %124 = vector.shape_cast %123 : vector<1x8x32xf32> to vector<8x32xf32>
    %125 = vector.shape_cast %121 : vector<8x32xf32> to vector<1x8x32xf32>
    tpu.vector_store %arg13[%122, %c0_40, %c0_41], %125 {strides = array<i32>} : memref<8x8x32xf32, #tpu.memory_space<vmem>>, vector<1x8x32xf32>,
    %c3_i32 = arith.constant 3 : i32
    %cst_42 = arith.constant dense<0.000000e+00> : vector<8x96xf32>
    %126 = tpu.matmul %121, %15, %cst_42 {dimension_numbers = #tpu.dot_dimension_numbers<[1], [0], [0], [1], [0, 0, 1, 1], [], []>} : vector<8x32xf32>, vector<32x96xf32>, vector<8x96xf32> -> vector<8x96xf32>
    %127 = vector.broadcast %16 : vector<1x96xf32> to vector<8x96xf32>
    %128 = arith.addf %126, %127 : vector<8x96xf32>
    %129 = arith.index_cast %c3_i32 : i32 to index
    %c0_43 = arith.constant 0 : index
    %c0_44 = arith.constant 0 : index
    %130 = vector.load %arg12[%129, %c0_43, %c0_44] : memref<8x8x96xf32, #tpu.memory_space<vmem>>, vector<1x8x96xf32>
    %131 = vector.shape_cast %130 : vector<1x8x96xf32> to vector<8x96xf32>
    %132 = vector.extract_strided_slice %131 {offsets = [0, 0], sizes = [8, 32], strides = [1, 1]} : vector<8x96xf32> to vector<8x32xf32>
    %133 = vector.extract_strided_slice %128 {offsets = [0, 0], sizes = [8, 32], strides = [1, 1]} : vector<8x96xf32> to vector<8x32xf32>
    %134 = arith.addf %132, %133 : vector<8x32xf32>
    %135 = arith.negf %134 : vector<8x32xf32>
    %136 = math.exp %135 : vector<8x32xf32>
    %cst_45 = arith.constant 1.000000e+00 : f32
    %137 = vector.broadcast %cst_45 : f32 to vector<8x32xf32>
    %138 = arith.addf %137, %136 : vector<8x32xf32>
    %139 = arith.divf %137, %138 : vector<8x32xf32>
    %140 = vector.extract_strided_slice %131 {offsets = [0, 32], sizes = [8, 32], strides = [1, 1]} : vector<8x96xf32> to vector<8x32xf32>
    %141 = vector.extract_strided_slice %128 {offsets = [0, 32], sizes = [8, 32], strides = [1, 1]} : vector<8x96xf32> to vector<8x32xf32>
    %142 = arith.addf %140, %141 : vector<8x32xf32>
    %143 = arith.negf %142 : vector<8x32xf32>
    %144 = math.exp %143 : vector<8x32xf32>
    %cst_46 = arith.constant 1.000000e+00 : f32
    %145 = vector.broadcast %cst_46 : f32 to vector<8x32xf32>
    %146 = arith.addf %145, %144 : vector<8x32xf32>
    %147 = arith.divf %145, %146 : vector<8x32xf32>
    %148 = vector.extract_strided_slice %131 {offsets = [0, 64], sizes = [8, 32], strides = [1, 1]} : vector<8x96xf32> to vector<8x32xf32>
    %149 = vector.extract_strided_slice %128 {offsets = [0, 64], sizes = [8, 32], strides = [1, 1]} : vector<8x96xf32> to vector<8x32xf32>
    %150 = arith.mulf %139, %149 : vector<8x32xf32>
    %151 = arith.addf %148, %150 : vector<8x32xf32>
    %152 = math.tanh %151 : vector<8x32xf32>
    %cst_47 = arith.constant 1.000000e+00 : f32
    %153 = vector.broadcast %cst_47 : f32 to vector<8x32xf32>
    %154 = arith.subf %153, %147 : vector<8x32xf32>
    %155 = arith.mulf %154, %152 : vector<8x32xf32>
    %156 = arith.mulf %147, %121 : vector<8x32xf32>
    %157 = arith.addf %155, %156 : vector<8x32xf32>
    %158 = arith.index_cast %c3_i32 : i32 to index
    %c0_48 = arith.constant 0 : index
    %c0_49 = arith.constant 0 : index
    %159 = vector.load %arg13[%158, %c0_48, %c0_49] : memref<8x8x32xf32, #tpu.memory_space<vmem>>, vector<1x8x32xf32>
    %160 = vector.shape_cast %159 : vector<1x8x32xf32> to vector<8x32xf32>
    %161 = vector.shape_cast %157 : vector<8x32xf32> to vector<1x8x32xf32>
    tpu.vector_store %arg13[%158, %c0_48, %c0_49], %161 {strides = array<i32>} : memref<8x8x32xf32, #tpu.memory_space<vmem>>, vector<1x8x32xf32>,
    %c4_i32 = arith.constant 4 : i32
    %cst_50 = arith.constant dense<0.000000e+00> : vector<8x96xf32>
    %162 = tpu.matmul %157, %15, %cst_50 {dimension_numbers = #tpu.dot_dimension_numbers<[1], [0], [0], [1], [0, 0, 1, 1], [], []>} : vector<8x32xf32>, vector<32x96xf32>, vector<8x96xf32> -> vector<8x96xf32>
    %163 = vector.broadcast %16 : vector<1x96xf32> to vector<8x96xf32>
    %164 = arith.addf %162, %163 : vector<8x96xf32>
    %165 = arith.index_cast %c4_i32 : i32 to index
    %c0_51 = arith.constant 0 : index
    %c0_52 = arith.constant 0 : index
    %166 = vector.load %arg12[%165, %c0_51, %c0_52] : memref<8x8x96xf32, #tpu.memory_space<vmem>>, vector<1x8x96xf32>
    %167 = vector.shape_cast %166 : vector<1x8x96xf32> to vector<8x96xf32>
    %168 = vector.extract_strided_slice %167 {offsets = [0, 0], sizes = [8, 32], strides = [1, 1]} : vector<8x96xf32> to vector<8x32xf32>
    %169 = vector.extract_strided_slice %164 {offsets = [0, 0], sizes = [8, 32], strides = [1, 1]} : vector<8x96xf32> to vector<8x32xf32>
    %170 = arith.addf %168, %169 : vector<8x32xf32>
    %171 = arith.negf %170 : vector<8x32xf32>
    %172 = math.exp %171 : vector<8x32xf32>
    %cst_53 = arith.constant 1.000000e+00 : f32
    %173 = vector.broadcast %cst_53 : f32 to vector<8x32xf32>
    %174 = arith.addf %173, %172 : vector<8x32xf32>
    %175 = arith.divf %173, %174 : vector<8x32xf32>
    %176 = vector.extract_strided_slice %167 {offsets = [0, 32], sizes = [8, 32], strides = [1, 1]} : vector<8x96xf32> to vector<8x32xf32>
    %177 = vector.extract_strided_slice %164 {offsets = [0, 32], sizes = [8, 32], strides = [1, 1]} : vector<8x96xf32> to vector<8x32xf32>
    %178 = arith.addf %176, %177 : vector<8x32xf32>
    %179 = arith.negf %178 : vector<8x32xf32>
    %180 = math.exp %179 : vector<8x32xf32>
    %cst_54 = arith.constant 1.000000e+00 : f32
    %181 = vector.broadcast %cst_54 : f32 to vector<8x32xf32>
    %182 = arith.addf %181, %180 : vector<8x32xf32>
    %183 = arith.divf %181, %182 : vector<8x32xf32>
    %184 = vector.extract_strided_slice %167 {offsets = [0, 64], sizes = [8, 32], strides = [1, 1]} : vector<8x96xf32> to vector<8x32xf32>
    %185 = vector.extract_strided_slice %164 {offsets = [0, 64], sizes = [8, 32], strides = [1, 1]} : vector<8x96xf32> to vector<8x32xf32>
    %186 = arith.mulf %175, %185 : vector<8x32xf32>
    %187 = arith.addf %184, %186 : vector<8x32xf32>
    %188 = math.tanh %187 : vector<8x32xf32>
    %cst_55 = arith.constant 1.000000e+00 : f32
    %189 = vector.broadcast %cst_55 : f32 to vector<8x32xf32>
    %190 = arith.subf %189, %183 : vector<8x32xf32>
    %191 = arith.mulf %190, %188 : vector<8x32xf32>
    %192 = arith.mulf %183, %157 : vector<8x32xf32>
    %193 = arith.addf %191, %192 : vector<8x32xf32>
    %194 = arith.index_cast %c4_i32 : i32 to index
    %c0_56 = arith.constant 0 : index
    %c0_57 = arith.constant 0 : index
    %195 = vector.load %arg13[%194, %c0_56, %c0_57] : memref<8x8x32xf32, #tpu.memory_space<vmem>>, vector<1x8x32xf32>
    %196 = vector.shape_cast %195 : vector<1x8x32xf32> to vector<8x32xf32>
    %197 = vector.shape_cast %193 : vector<8x32xf32> to vector<1x8x32xf32>
    tpu.vector_store %arg13[%194, %c0_56, %c0_57], %197 {strides = array<i32>} : memref<8x8x32xf32, #tpu.memory_space<vmem>>, vector<1x8x32xf32>,
    %c5_i32 = arith.constant 5 : i32
    %cst_58 = arith.constant dense<0.000000e+00> : vector<8x96xf32>
    %198 = tpu.matmul %193, %15, %cst_58 {dimension_numbers = #tpu.dot_dimension_numbers<[1], [0], [0], [1], [0, 0, 1, 1], [], []>} : vector<8x32xf32>, vector<32x96xf32>, vector<8x96xf32> -> vector<8x96xf32>
    %199 = vector.broadcast %16 : vector<1x96xf32> to vector<8x96xf32>
    %200 = arith.addf %198, %199 : vector<8x96xf32>
    %201 = arith.index_cast %c5_i32 : i32 to index
    %c0_59 = arith.constant 0 : index
    %c0_60 = arith.constant 0 : index
    %202 = vector.load %arg12[%201, %c0_59, %c0_60] : memref<8x8x96xf32, #tpu.memory_space<vmem>>, vector<1x8x96xf32>
    %203 = vector.shape_cast %202 : vector<1x8x96xf32> to vector<8x96xf32>
    %204 = vector.extract_strided_slice %203 {offsets = [0, 0], sizes = [8, 32], strides = [1, 1]} : vector<8x96xf32> to vector<8x32xf32>
    %205 = vector.extract_strided_slice %200 {offsets = [0, 0], sizes = [8, 32], strides = [1, 1]} : vector<8x96xf32> to vector<8x32xf32>
    %206 = arith.addf %204, %205 : vector<8x32xf32>
    %207 = arith.negf %206 : vector<8x32xf32>
    %208 = math.exp %207 : vector<8x32xf32>
    %cst_61 = arith.constant 1.000000e+00 : f32
    %209 = vector.broadcast %cst_61 : f32 to vector<8x32xf32>
    %210 = arith.addf %209, %208 : vector<8x32xf32>
    %211 = arith.divf %209, %210 : vector<8x32xf32>
    %212 = vector.extract_strided_slice %203 {offsets = [0, 32], sizes = [8, 32], strides = [1, 1]} : vector<8x96xf32> to vector<8x32xf32>
    %213 = vector.extract_strided_slice %200 {offsets = [0, 32], sizes = [8, 32], strides = [1, 1]} : vector<8x96xf32> to vector<8x32xf32>
    %214 = arith.addf %212, %213 : vector<8x32xf32>
    %215 = arith.negf %214 : vector<8x32xf32>
    %216 = math.exp %215 : vector<8x32xf32>
    %cst_62 = arith.constant 1.000000e+00 : f32
    %217 = vector.broadcast %cst_62 : f32 to vector<8x32xf32>
    %218 = arith.addf %217, %216 : vector<8x32xf32>
    %219 = arith.divf %217, %218 : vector<8x32xf32>
    %220 = vector.extract_strided_slice %203 {offsets = [0, 64], sizes = [8, 32], strides = [1, 1]} : vector<8x96xf32> to vector<8x32xf32>
    %221 = vector.extract_strided_slice %200 {offsets = [0, 64], sizes = [8, 32], strides = [1, 1]} : vector<8x96xf32> to vector<8x32xf32>
    %222 = arith.mulf %211, %221 : vector<8x32xf32>
    %223 = arith.addf %220, %222 : vector<8x32xf32>
    %224 = math.tanh %223 : vector<8x32xf32>
    %cst_63 = arith.constant 1.000000e+00 : f32
    %225 = vector.broadcast %cst_63 : f32 to vector<8x32xf32>
    %226 = arith.subf %225, %219 : vector<8x32xf32>
    %227 = arith.mulf %226, %224 : vector<8x32xf32>
    %228 = arith.mulf %219, %193 : vector<8x32xf32>
    %229 = arith.addf %227, %228 : vector<8x32xf32>
    %230 = arith.index_cast %c5_i32 : i32 to index
    %c0_64 = arith.constant 0 : index
    %c0_65 = arith.constant 0 : index
    %231 = vector.load %arg13[%230, %c0_64, %c0_65] : memref<8x8x32xf32, #tpu.memory_space<vmem>>, vector<1x8x32xf32>
    %232 = vector.shape_cast %231 : vector<1x8x32xf32> to vector<8x32xf32>
    %233 = vector.shape_cast %229 : vector<8x32xf32> to vector<1x8x32xf32>
    tpu.vector_store %arg13[%230, %c0_64, %c0_65], %233 {strides = array<i32>} : memref<8x8x32xf32, #tpu.memory_space<vmem>>, vector<1x8x32xf32>,
    %c6_i32 = arith.constant 6 : i32
    %cst_66 = arith.constant dense<0.000000e+00> : vector<8x96xf32>
    %234 = tpu.matmul %229, %15, %cst_66 {dimension_numbers = #tpu.dot_dimension_numbers<[1], [0], [0], [1], [0, 0, 1, 1], [], []>} : vector<8x32xf32>, vector<32x96xf32>, vector<8x96xf32> -> vector<8x96xf32>
    %235 = vector.broadcast %16 : vector<1x96xf32> to vector<8x96xf32>
    %236 = arith.addf %234, %235 : vector<8x96xf32>
    %237 = arith.index_cast %c6_i32 : i32 to index
    %c0_67 = arith.constant 0 : index
    %c0_68 = arith.constant 0 : index
    %238 = vector.load %arg12[%237, %c0_67, %c0_68] : memref<8x8x96xf32, #tpu.memory_space<vmem>>, vector<1x8x96xf32>
    %239 = vector.shape_cast %238 : vector<1x8x96xf32> to vector<8x96xf32>
    %240 = vector.extract_strided_slice %239 {offsets = [0, 0], sizes = [8, 32], strides = [1, 1]} : vector<8x96xf32> to vector<8x32xf32>
    %241 = vector.extract_strided_slice %236 {offsets = [0, 0], sizes = [8, 32], strides = [1, 1]} : vector<8x96xf32> to vector<8x32xf32>
    %242 = arith.addf %240, %241 : vector<8x32xf32>
    %243 = arith.negf %242 : vector<8x32xf32>
    %244 = math.exp %243 : vector<8x32xf32>
    %cst_69 = arith.constant 1.000000e+00 : f32
    %245 = vector.broadcast %cst_69 : f32 to vector<8x32xf32>
    %246 = arith.addf %245, %244 : vector<8x32xf32>
    %247 = arith.divf %245, %246 : vector<8x32xf32>
    %248 = vector.extract_strided_slice %239 {offsets = [0, 32], sizes = [8, 32], strides = [1, 1]} : vector<8x96xf32> to vector<8x32xf32>
    %249 = vector.extract_strided_slice %236 {offsets = [0, 32], sizes = [8, 32], strides = [1, 1]} : vector<8x96xf32> to vector<8x32xf32>
    %250 = arith.addf %248, %249 : vector<8x32xf32>
    %251 = arith.negf %250 : vector<8x32xf32>
    %252 = math.exp %251 : vector<8x32xf32>
    %cst_70 = arith.constant 1.000000e+00 : f32
    %253 = vector.broadcast %cst_70 : f32 to vector<8x32xf32>
    %254 = arith.addf %253, %252 : vector<8x32xf32>
    %255 = arith.divf %253, %254 : vector<8x32xf32>
    %256 = vector.extract_strided_slice %239 {offsets = [0, 64], sizes = [8, 32], strides = [1, 1]} : vector<8x96xf32> to vector<8x32xf32>
    %257 = vector.extract_strided_slice %236 {offsets = [0, 64], sizes = [8, 32], strides = [1, 1]} : vector<8x96xf32> to vector<8x32xf32>
    %258 = arith.mulf %247, %257 : vector<8x32xf32>
    %259 = arith.addf %256, %258 : vector<8x32xf32>
    %260 = math.tanh %259 : vector<8x32xf32>
    %cst_71 = arith.constant 1.000000e+00 : f32
    %261 = vector.broadcast %cst_71 : f32 to vector<8x32xf32>
    %262 = arith.subf %261, %255 : vector<8x32xf32>
    %263 = arith.mulf %262, %260 : vector<8x32xf32>
    %264 = arith.mulf %255, %229 : vector<8x32xf32>
    %265 = arith.addf %263, %264 : vector<8x32xf32>
    %266 = arith.index_cast %c6_i32 : i32 to index
    %c0_72 = arith.constant 0 : index
    %c0_73 = arith.constant 0 : index
    %267 = vector.load %arg13[%266, %c0_72, %c0_73] : memref<8x8x32xf32, #tpu.memory_space<vmem>>, vector<1x8x32xf32>
    %268 = vector.shape_cast %267 : vector<1x8x32xf32> to vector<8x32xf32>
    %269 = vector.shape_cast %265 : vector<8x32xf32> to vector<1x8x32xf32>
    tpu.vector_store %arg13[%266, %c0_72, %c0_73], %269 {strides = array<i32>} : memref<8x8x32xf32, #tpu.memory_space<vmem>>, vector<1x8x32xf32>,
    %c7_i32 = arith.constant 7 : i32
    %cst_74 = arith.constant dense<0.000000e+00> : vector<8x96xf32>
    %270 = tpu.matmul %265, %15, %cst_74 {dimension_numbers = #tpu.dot_dimension_numbers<[1], [0], [0], [1], [0, 0, 1, 1], [], []>} : vector<8x32xf32>, vector<32x96xf32>, vector<8x96xf32> -> vector<8x96xf32>
    %271 = vector.broadcast %16 : vector<1x96xf32> to vector<8x96xf32>
    %272 = arith.addf %270, %271 : vector<8x96xf32>
    %273 = arith.index_cast %c7_i32 : i32 to index
    %c0_75 = arith.constant 0 : index
    %c0_76 = arith.constant 0 : index
    %274 = vector.load %arg12[%273, %c0_75, %c0_76] : memref<8x8x96xf32, #tpu.memory_space<vmem>>, vector<1x8x96xf32>
    %275 = vector.shape_cast %274 : vector<1x8x96xf32> to vector<8x96xf32>
    %276 = vector.extract_strided_slice %275 {offsets = [0, 0], sizes = [8, 32], strides = [1, 1]} : vector<8x96xf32> to vector<8x32xf32>
    %277 = vector.extract_strided_slice %272 {offsets = [0, 0], sizes = [8, 32], strides = [1, 1]} : vector<8x96xf32> to vector<8x32xf32>
    %278 = arith.addf %276, %277 : vector<8x32xf32>
    %279 = arith.negf %278 : vector<8x32xf32>
    %280 = math.exp %279 : vector<8x32xf32>
    %cst_77 = arith.constant 1.000000e+00 : f32
    %281 = vector.broadcast %cst_77 : f32 to vector<8x32xf32>
    %282 = arith.addf %281, %280 : vector<8x32xf32>
    %283 = arith.divf %281, %282 : vector<8x32xf32>
    %284 = vector.extract_strided_slice %275 {offsets = [0, 32], sizes = [8, 32], strides = [1, 1]} : vector<8x96xf32> to vector<8x32xf32>
    %285 = vector.extract_strided_slice %272 {offsets = [0, 32], sizes = [8, 32], strides = [1, 1]} : vector<8x96xf32> to vector<8x32xf32>
    %286 = arith.addf %284, %285 : vector<8x32xf32>
    %287 = arith.negf %286 : vector<8x32xf32>
    %288 = math.exp %287 : vector<8x32xf32>
    %cst_78 = arith.constant 1.000000e+00 : f32
    %289 = vector.broadcast %cst_78 : f32 to vector<8x32xf32>
    %290 = arith.addf %289, %288 : vector<8x32xf32>
    %291 = arith.divf %289, %290 : vector<8x32xf32>
    %292 = vector.extract_strided_slice %275 {offsets = [0, 64], sizes = [8, 32], strides = [1, 1]} : vector<8x96xf32> to vector<8x32xf32>
    %293 = vector.extract_strided_slice %272 {offsets = [0, 64], sizes = [8, 32], strides = [1, 1]} : vector<8x96xf32> to vector<8x32xf32>
    %294 = arith.mulf %283, %293 : vector<8x32xf32>
    %295 = arith.addf %292, %294 : vector<8x32xf32>
    %296 = math.tanh %295 : vector<8x32xf32>
    %cst_79 = arith.constant 1.000000e+00 : f32
    %297 = vector.broadcast %cst_79 : f32 to vector<8x32xf32>
    %298 = arith.subf %297, %291 : vector<8x32xf32>
    %299 = arith.mulf %298, %296 : vector<8x32xf32>
    %300 = arith.mulf %291, %265 : vector<8x32xf32>
    %301 = arith.addf %299, %300 : vector<8x32xf32>
    %302 = arith.index_cast %c7_i32 : i32 to index
    %c0_80 = arith.constant 0 : index
    %c0_81 = arith.constant 0 : index
    %303 = vector.load %arg13[%302, %c0_80, %c0_81] : memref<8x8x32xf32, #tpu.memory_space<vmem>>, vector<1x8x32xf32>
    %304 = vector.shape_cast %303 : vector<1x8x32xf32> to vector<8x32xf32>
    %305 = vector.shape_cast %301 : vector<8x32xf32> to vector<1x8x32xf32>
    tpu.vector_store %arg13[%302, %c0_80, %c0_81], %305 {strides = array<i32>} : memref<8x8x32xf32, #tpu.memory_space<vmem>>, vector<1x8x32xf32>,
    %c8_i32 = arith.constant 8 : i32
    %c0_82 = arith.constant 0 : index
    %c0_83 = arith.constant 0 : index
    %306 = vector.load %arg11[%c0_82, %c0_83] : memref<8x32xf32, #tpu.memory_space<vmem>>, vector<8x32xf32>
    tpu.vector_store %arg11[%c0_82, %c0_83], %301 {strides = array<i32>} : memref<8x32xf32, #tpu.memory_space<vmem>>, vector<8x32xf32>,
    %c0_i32_84 = arith.constant 0 : i32
    %307 = arith.cmpi eq, %arg1, %c0_i32_84 : i32
    %308 = arith.extui %307 : i1 to i32
    %c0_i32_85 = arith.constant 0 : i32
    %309 = arith.cmpi ne, %308, %c0_i32_85 : i32
    scf.if %309 {
      %c0_109 = arith.constant 0 : index
      %c0_110 = arith.constant 0 : index
      %348 = vector.load %arg10[%c0_109, %c0_110] : memref<8x32xf32, #tpu.memory_space<vmem>>, vector<8x32xf32>
      tpu.vector_store %arg10[%c0_109, %c0_110], %301 {strides = array<i32>} : memref<8x32xf32, #tpu.memory_space<vmem>>, vector<8x32xf32>,
    } else {
    }
    %c0_86 = arith.constant 0 : index
    %c0_87 = arith.constant 0 : index
    %c0_88 = arith.constant 0 : index
    %310 = vector.load %arg13[%c0_86, %c0_87, %c0_88] : memref<8x8x32xf32, #tpu.memory_space<vmem>>, vector<8x8x32xf32>
    %311 = tpu.transpose %310, [1, 0, 2] : vector<8x8x32xf32> -> vector<8x8x32xf32>
    %312 = vector.shape_cast %311 : vector<8x8x32xf32> to vector<64x32xf32>
    %cst_89 = arith.constant -1.000000e+30 : f32
    %313 = vector.broadcast %cst_89 : f32 to vector<64x1xf32>
    %cst_90 = arith.constant 0.000000e+00 : f32
    %314 = vector.broadcast %cst_90 : f32 to vector<64x1xf32>
    %c0_91 = arith.constant 0 : index
    %c0_92 = arith.constant 0 : index
    %315 = vector.load %arg7[%c0_91, %c0_92] : memref<32x128xf32, #tpu.memory_space<vmem>>, vector<32x128xf32>
    %cst_93 = arith.constant dense<0.000000e+00> : vector<64x128xf32>
    %316 = tpu.matmul %312, %315, %cst_93 {dimension_numbers = #tpu.dot_dimension_numbers<[1], [0], [0], [1], [0, 0, 1, 1], [], []>} : vector<64x32xf32>, vector<32x128xf32>, vector<64x128xf32> -> vector<64x128xf32>
    %c0_94 = arith.constant 0 : index
    %c0_95 = arith.constant 0 : index
    %317 = vector.load %arg8[%c0_94, %c0_95] : memref<1x128xf32, #tpu.memory_space<vmem>>, vector<1x128xf32>
    %318 = vector.broadcast %317 : vector<1x128xf32> to vector<64x128xf32>
    %319 = arith.addf %316, %318 : vector<64x128xf32>
    %320 = tpu.iota {dimensions = array<i32: 1>} : vector<64x128xi32>
    %c0_i32_96 = arith.constant 0 : i32
    %321 = vector.broadcast %c0_i32_96 : i32 to vector<64x128xi32>
    %322 = arith.addi %321, %320 : vector<64x128xi32>
    %c64_i32 = arith.constant 64 : i32
    %323 = vector.broadcast %c64_i32 : i32 to vector<64x128xi32>
    %324 = arith.cmpi slt, %322, %323 : vector<64x128xi32>
    %cst_97 = arith.constant -1.000000e+30 : f32
    %325 = vector.broadcast %cst_97 : f32 to vector<64x128xf32>
    %326 = arith.select %324, %319, %325 : vector<64x128xi1>, vector<64x128xf32>
    %327 = vector.shape_cast %326 : vector<64x128xf32> to vector<8x8x128xf32>
    %c0_98 = arith.constant 0 : index
    %c0_99 = arith.constant 0 : index
    %c0_100 = arith.constant 0 : index
    %328 = vector.load %arg9[%c0_98, %c0_99, %c0_100] : memref<8x8x128xf32, #tpu.memory_space<vmem>>, vector<8x8x128xf32>
    tpu.vector_store %arg9[%c0_98, %c0_99, %c0_100], %327 {strides = array<i32>} : memref<8x8x128xf32, #tpu.memory_space<vmem>>, vector<8x8x128xf32>,
    %cst_101 = arith.constant dense<0xFF800000> : vector<64xf32>
    %329 = vector.multi_reduction <maximumf>, %326, %cst_101 [1] : vector<64x128xf32> to vector<64xf32>
    %330 = vector.shape_cast %329 : vector<64xf32> to vector<64x1xf32>
    %331 = arith.maximumf %313, %330 : vector<64x1xf32>
    %332 = arith.subf %313, %331 : vector<64x1xf32>
    %333 = math.exp %332 : vector<64x1xf32>
    %334 = arith.mulf %314, %333 : vector<64x1xf32>
    %335 = vector.broadcast %331 : vector<64x1xf32> to vector<64x128xf32>
    %336 = arith.subf %326, %335 : vector<64x128xf32>
    %337 = math.exp %336 : vector<64x128xf32>
    %cst_102 = arith.constant dense<0.000000e+00> : vector<64xf32>
    %338 = vector.multi_reduction <add>, %337, %cst_102 [1] : vector<64x128xf32> to vector<64xf32>
    %339 = vector.shape_cast %338 : vector<64xf32> to vector<64x1xf32>
    %340 = arith.addf %334, %339 : vector<64x1xf32>
    %341 = math.log %340 : vector<64x1xf32>
    %342 = arith.addf %331, %341 : vector<64x1xf32>
    %343 = vector.shape_cast %342 : vector<64x1xf32> to vector<8x8x1xf32>
    %c0_103 = arith.constant 0 : index
    %c0_104 = arith.constant 0 : index
    %c0_105 = arith.constant 0 : index
    %344 = vector.load %arg9[%c0_103, %c0_104, %c0_105] : memref<8x8x128xf32, #tpu.memory_space<vmem>>, vector<8x8x128xf32>
    %345 = vector.broadcast %343 : vector<8x8x1xf32> to vector<8x8x128xf32>
    %346 = arith.subf %344, %345 : vector<8x8x128xf32>
    %c0_106 = arith.constant 0 : index
    %c0_107 = arith.constant 0 : index
    %c0_108 = arith.constant 0 : index
    %347 = vector.load %arg9[%c0_106, %c0_107, %c0_108] : memref<8x8x128xf32, #tpu.memory_space<vmem>>, vector<8x8x128xf32>
    tpu.vector_store %arg9[%c0_106, %c0_107, %c0_108], %346 {strides = array<i32>} : memref<8x8x128xf32, #tpu.memory_space<vmem>>, vector<8x8x128xf32>,
    return
  }
  func.func @transform_0(%arg0: i32, %arg1: i32) -> (i32, i32, i32) {
    %c0_i32 = arith.constant 0 : i32
    %c0_i32_0 = arith.constant 0 : i32
    return %arg1, %arg0, %c0_i32 : i32, i32, i32
  }
  func.func @transform_1(%arg0: i32, %arg1: i32) -> (i32, i32) {
    %c0_i32 = arith.constant 0 : i32
    %c0_i32_0 = arith.constant 0 : i32
    return %arg0, %c0_i32 : i32, i32
  }
  func.func @transform_2(%arg0: i32, %arg1: i32) -> (i32, i32) {
    %c0_i32 = arith.constant 0 : i32
    %c0_i32_0 = arith.constant 0 : i32
    %c0_i32_1 = arith.constant 0 : i32
    return %c0_i32, %c0_i32_0 : i32, i32
  }
  func.func @transform_3(%arg0: i32, %arg1: i32) -> (i32, i32) {
    %c0_i32 = arith.constant 0 : i32
    %c0_i32_0 = arith.constant 0 : i32
    %c0_i32_1 = arith.constant 0 : i32
    return %c0_i32, %c0_i32_0 : i32, i32
  }
  func.func @transform_4(%arg0: i32, %arg1: i32) -> (i32, i32) {
    %c0_i32 = arith.constant 0 : i32
    %c0_i32_0 = arith.constant 0 : i32
    %c0_i32_1 = arith.constant 0 : i32
    return %c0_i32, %c0_i32_0 : i32, i32
  }
  func.func @transform_5(%arg0: i32, %arg1: i32) -> (i32, i32) {
    %c0_i32 = arith.constant 0 : i32
    %c0_i32_0 = arith.constant 0 : i32
    %c0_i32_1 = arith.constant 0 : i32
    return %c0_i32, %c0_i32_0 : i32, i32
  }
  func.func @transform_6(%arg0: i32, %arg1: i32) -> (i32, i32) {
    %c0_i32 = arith.constant 0 : i32
    %c0_i32_0 = arith.constant 0 : i32
    %c0_i32_1 = arith.constant 0 : i32
    return %c0_i32, %c0_i32_0 : i32, i32
  }
  func.func @transform_7(%arg0: i32, %arg1: i32) -> (i32, i32, i32) {
    %c0_i32 = arith.constant 0 : i32
    %c0_i32_0 = arith.constant 0 : i32
    return %arg0, %arg1, %c0_i32 : i32, i32, i32
  }
  func.func @transform_8(%arg0: i32, %arg1: i32) -> (i32, i32) {
    %c0_i32 = arith.constant 0 : i32
    %c0_i32_0 = arith.constant 0 : i32
    return %arg0, %c0_i32 : i32, i32
  }
}

</mosaic_0001>

<llo_original>
// kernel: tpu_custom_call.1
$region0: #{tpu_custom_call.1}
  #allocation0 [shape = 'u32[]', space=smem, size = 0x4, offset = 0x4, fixed_abs, tag = 'smem constant byte address 0x4 - core index']
  #allocation1 [shape = 'u32[72,128]{1,0:T(1,128)}', space=vmem, size = 0x9000, scoped, tag = 'internal scratch']
  #allocation2 [shape = 'f32[8,32]{1,0:T(8,128)}', space=vmem, size = 0x1000, scoped, tag = 'scratch operand']
  #allocation3 [shape = 'f32[8,8,96]{2,1,0:T(8,128)}', space=vmem, size = 0x8000, scoped, tag = 'scratch operand']
  #allocation4 [shape = 'f32[8,8,32]{2,1,0:T(8,128)}', space=vmem, size = 0x8000, scoped, tag = 'scratch operand']
  %s0 = inlined_call_operand.hbm [shape: f32[8,8,32], index: 0, kind: input, shape index: {}]
  %s1 = inlined_call_operand.hbm [shape: f32[8,96], index: 1, kind: input, shape index: {}]
  %s2 = inlined_call_operand.hbm [shape: f32[32,96], index: 2, kind: input, shape index: {}]
  %s3 = inlined_call_operand.hbm [shape: f32[32,96], index: 3, kind: input, shape index: {}]
  %s4 = inlined_call_operand.vmem [shape: f32[1,96], index: 4, kind: input, shape index: {}]
  %s5 = inlined_call_operand.hbm [shape: f32[32,128], index: 5, kind: input, shape index: {}]
  %s6 = inlined_call_operand.vmem [shape: f32[1,128], index: 6, kind: input, shape index: {}]
  %s7 = inlined_call_operand.hbm [shape: f32[8,8,128], index: 7, kind: output, shape index: {0}]
  %s8 = inlined_call_operand.hbm [shape: f32[8,32], index: 8, kind: output, shape index: {1}]
  %9 = xla_tuple %s7, %s8
  %s10 = sld [smem:[#allocation0]]
  $region74: #{tpu_custom_call.1} parent=0
    _
  %s12 = ssub.s32 1, %s10
  %s13 = scalar_select 0, %s12, %s10
  $region1: #{tpu_custom_call.1} parent=0
    #allocation5 [shape = 'u8[32768]{0}', space=vmem, size = 0x8000, scoped, tag = 'input window, operand 0, single buffered']
    #allocation6 [shape = 's32[1]{0}', space=sflag, size = 0x4, scoped, tag = 'scoped memory for tpu_custom_call.1']
    #allocation7 [shape = 's32[1]{0}', space=sflag, size = 0x4, scoped, tag = 'scoped memory for tpu_custom_call.1']
    #allocation8 [shape = 'u8[4096]{0}', space=vmem, size = 0x1000, scoped, tag = 'input window, operand 1, single buffered']
    #allocation9 [shape = 's32[1]{0}', space=sflag, size = 0x4, scoped, tag = 'scoped memory for tpu_custom_call.1']
    #allocation10 [shape = 'u8[16384]{0}', space=vmem, size = 0x4000, scoped, tag = 'input window, operand 2, single buffered']
    #allocation11 [shape = 'u8[16384]{0}', space=vmem, size = 0x4000, scoped, tag = 'input window, operand 3, single buffered']
    #allocation12 [shape = 's32[1]{0}', space=sflag, size = 0x4, scoped, tag = 'scoped memory for tpu_custom_call.1']
    #allocation13 [shape = 'u8[16384]{0}', space=vmem, size = 0x4000, scoped, tag = 'input window, operand 5, single buffered']
    #allocation14 [shape = 'u8[32768]{0}', space=vmem, size = 0x8000, scoped, tag = 'output window, operand 0, single buffered']
    #allocation15 [shape = 'u8[4096]{0}', space=vmem, size = 0x1000, scoped, tag = 'output window, operand 1, single buffered']
    #allocation16 [shape = 's32[1]{0}', space=sflag, size = 0x4, scoped, tag = 'scoped memory for tpu_custom_call.1']
    %14 = vsyncpa [#allocation6], 0
    %15 = vsyncpa [#allocation9], 0
    %16 = vsyncpa [#allocation12], 0
    %17 = vsyncpa [#allocation7], 0
    %18 = vsyncpa [#allocation16], 0
    // Predicated region
    $region2: #{tpu_custom_call.1} parent=1 // pred_check
      _
    $region3: #{tpu_custom_call.1} parent=1 // pred_check_branch
      %20 = sbr.rel (0) target = $region5
    $region4: #{tpu_custom_call.1} parent=1 // pred_region
      %22 = vsyncadd [#allocation6], 0
      %s23 = sshll.u32 %s0, 4
      %s24 = int_to_ptr.hbm [resolvable:$true] %s23
      %s25 = sshll.u32 [#allocation5], 4
      %s26 = int_to_ptr.vmem [resolvable:$true] %s25
      %31 = dma.hbm_to_vmem [thread:$0]  %s24, 1024, %s26, [#allocation6], 128, 128, 8
    $region5: #{tpu_custom_call.1} parent=1 // pred_fallthru
      _
    // Predicated region
    $region6: #{tpu_custom_call.1} parent=1 // pred_check
      _
    $region7: #{tpu_custom_call.1} parent=1 // pred_check_branch
      %33 = sbr.rel (0) target = $region9
    $region8: #{tpu_custom_call.1} parent=1 // pred_region
      %35 = vsyncadd [#allocation9], 0
      %s37 = sshll.u32 %s1, 4
      %s38 = int_to_ptr.hbm [resolvable:$true] %s37
      %s39 = sshll.u32 [#allocation8], 4
      %s40 = int_to_ptr.vmem [resolvable:$true] %s39
      %42 = dma.hbm_to_vmem [thread:$0]  %s38, 128, %s40, [#allocation9]
    $region9: #{tpu_custom_call.1} parent=1 // pred_fallthru
      _
    // Predicated region
    $region10: #{tpu_custom_call.1} parent=1 // pred_check
      _
    $region11: #{tpu_custom_call.1} parent=1 // pred_check_branch
      %44 = sbr.rel (0) target = $region13
    $region12: #{tpu_custom_call.1} parent=1 // pred_region
      %46 = vsyncadd [#allocation9], 0
      %s47 = sshll.u32 %s2, 4
      %s48 = int_to_ptr.hbm [resolvable:$true] %s47
      %s49 = sshll.u32 [#allocation10], 4
      %s50 = int_to_ptr.vmem [resolvable:$true] %s49
      %55 = dma.hbm_to_vmem [thread:$0]  %s48, 512, %s50, [#allocation9], 128, 128, 8
    $region13: #{tpu_custom_call.1} parent=1 // pred_fallthru
      _
    // Predicated region
    $region14: #{tpu_custom_call.1} parent=1 // pred_check
      _
    $region15: #{tpu_custom_call.1} parent=1 // pred_check_branch
      %57 = sbr.rel (0) target = $region17
    $region16: #{tpu_custom_call.1} parent=1 // pred_region
      %59 = vsyncadd [#allocation12], 0
      %s60 = sshll.u32 %s3, 4
      %s61 = int_to_ptr.hbm [resolvable:$true] %s60
      %s62 = sshll.u32 [#allocation11], 4
      %s63 = int_to_ptr.vmem [resolvable:$true] %s62
      %68 = dma.hbm_to_vmem [thread:$0]  %s61, 512, %s63, [#allocation12], 128, 128, 8
    $region17: #{tpu_custom_call.1} parent=1 // pred_fallthru
      _
    // Predicated region
    $region18: #{tpu_custom_call.1} parent=1 // pred_check
      _
    $region19: #{tpu_custom_call.1} parent=1 // pred_check_branch
      %70 = sbr.rel (0) target = $region21
    $region20: #{tpu_custom_call.1} parent=1 // pred_region
      _
    $region21: #{tpu_custom_call.1} parent=1 // pred_fallthru
      _
    // Predicated region
    $region22: #{tpu_custom_call.1} parent=1 // pred_check
      _
    $region23: #{tpu_custom_call.1} parent=1 // pred_check_branch
      %72 = sbr.rel (0) target = $region25
    $region24: #{tpu_custom_call.1} parent=1 // pred_region
      %74 = vsyncadd [#allocation12], 0
      %s75 = sshll.u32 %s5, 4
      %s76 = int_to_ptr.hbm [resolvable:$true] %s75
      %s77 = sshll.u32 [#allocation13], 4
      %s78 = int_to_ptr.vmem [resolvable:$true] %s77
      %83 = dma.hbm_to_vmem [thread:$0]  %s76, 512, %s78, [#allocation12], 128, 128, 8
    $region25: #{tpu_custom_call.1} parent=1 // pred_fallthru
      _
    // Predicated region
    $region26: #{tpu_custom_call.1} parent=1 // pred_check
      _
    $region27: #{tpu_custom_call.1} parent=1 // pred_check_branch
      %85 = sbr.rel (0) target = $region29
    $region28: #{tpu_custom_call.1} parent=1 // pred_region
      _
    $region29: #{tpu_custom_call.1} parent=1 // pred_fallthru
      _
    // Predicated region
    $region30: #{tpu_custom_call.1} parent=1 // pred_check
      _
    $region31: #{tpu_custom_call.1} parent=1 // pred_check_branch
      %87 = sbr.rel (0) target = $region33
    $region32: #{tpu_custom_call.1} parent=1 // pred_region
      %89 = dma.done [#allocation6], 1024
    $region33: #{tpu_custom_call.1} parent=1 // pred_fallthru
      _
    // Predicated region
    $region34: #{tpu_custom_call.1} parent=1 // pred_check
      _
    $region35: #{tpu_custom_call.1} parent=1 // pred_check_branch
      %91 = sbr.rel (0) target = $region37
    $region36: #{tpu_custom_call.1} parent=1 // pred_region
      %93 = dma.done [#allocation9], 128
    $region37: #{tpu_custom_call.1} parent=1 // pred_fallthru
      _
    // Predicated region
    $region38: #{tpu_custom_call.1} parent=1 // pred_check
      _
    $region39: #{tpu_custom_call.1} parent=1 // pred_check_branch
      %95 = sbr.rel (0) target = $region41
    $region40: #{tpu_custom_call.1} parent=1 // pred_region
      %97 = dma.done [#allocation9], 512
    $region41: #{tpu_custom_call.1} parent=1 // pred_fallthru
      _
    // Predicated region
    $region42: #{tpu_custom_call.1} parent=1 // pred_check
      _
    $region43: #{tpu_custom_call.1} parent=1 // pred_check_branch
      %99 = sbr.rel (0) target = $region45
    $region44: #{tpu_custom_call.1} parent=1 // pred_region
      %101 = dma.done [#allocation12], 512
    $region45: #{tpu_custom_call.1} parent=1 // pred_fallthru
      _
    // Predicated region
    $region46: #{tpu_custom_call.1} parent=1 // pred_check
      _
    $region47: #{tpu_custom_call.1} parent=1 // pred_check_branch
      %103 = sbr.rel (0) target = $region49
    $region48: #{tpu_custom_call.1} parent=1 // pred_region
      %105 = dma.done [#allocation12], 512
    $region49: #{tpu_custom_call.1} parent=1 // pred_fallthru
      _
    %p106 = scmp.eq.s32.totalorder 0, 0
    // Predicated region
    $region50: #{tpu_custom_call.1} parent=1 // pred_check
      %p107 = pneg %p106
    $region51: #{tpu_custom_call.1} parent=1 // pred_check_branch
      %109 = sbr.rel (%p107) target = $region53
    $region52: #{tpu_custom_call.1} parent=1 // pred_region
      %vm110 = vcmask 261120
      %111 = vst.msk [vmem:[#allocation2] sm:$0xff] %vm110, 0.0
    $region53: #{tpu_custom_call.1} parent=1 // pred_fallthru
      _
    %v112 = vld [vmem:[#allocation5] sm:$0xff]
    %v113 = vld [vmem:[#allocation5 + $0x8] sm:$0xff]
    %v114 = vld [vmem:[#allocation5 + $0x10] sm:$0xff]
    %v115 = vld [vmem:[#allocation5 + $0x18] sm:$0xff]
    %v116 = vld [vmem:[#allocation5 + $0x20] sm:$0xff]
    %v117 = vld [vmem:[#allocation5 + $0x28] sm:$0xff]
    %v118 = vld [vmem:[#allocation5 + $0x30] sm:$0xff]
    %v119 = vld [vmem:[#allocation5 + $0x38] sm:$0xff]
    %v120 = vmax.f32 %v112, 0.0
    %v121 = vmax.f32 %v113, 0.0
    %v122 = vmax.f32 %v114, 0.0
    %v123 = vmax.f32 %v115, 0.0
    %v124 = vmax.f32 %v116, 0.0
    %v125 = vmax.f32 %v117, 0.0
    %v126 = vmax.f32 %v118, 0.0
    %v127 = vmax.f32 %v119, 0.0
    %v128 = vld [vmem:[#allocation10] sm:$0xff]
    %v129 = vld [vmem:[#allocation10 + $0x8] sm:$0xff]
    %v130 = vld [vmem:[#allocation10 + $0x10] sm:$0xff]
    %v131 = vld [vmem:[#allocation10 + $0x18] sm:$0xff]
    %vm132 = vcmask 261120
    %v134 = vsel %vm132, %v120, 0
    %v137 = vsel %vm132, %v121, 0
    %v140 = vsel %vm132, %v122, 0
    %v143 = vsel %vm132, %v123, 0
    %v146 = vsel %vm132, %v124, 0
    %v149 = vsel %vm132, %v125, 0
    %v152 = vsel %vm132, %v126, 0
    %v155 = vsel %vm132, %v127, 0
    %157 = vmatpush.msra.mxu0 0.0
    %158 = vmatpush.msra.mxu0 0.0
    %159 = vmatpush.msra.mxu0 0.0
    %160 = vmatpush.msra.mxu0 0.0
    %161 = vmatpush.msra.mxu0 0.0
    %162 = vmatpush.msra.mxu0 0.0
    %163 = vmatpush.msra.mxu0 0.0
    %164 = vmatpush.msra.mxu0 0.0
    %165 = vmatpush.msra.mxu0 0.0
    %166 = vmatpush.msra.mxu0 0.0
    %167 = vmatpush.msra.mxu0 0.0
    %168 = vmatpush.msra.mxu0 0.0
    %169 = vmatpush.msra.mxu0 %v131
    %170 = vmatpush.msra.mxu0 %v130
    %171 = vmatpush.msra.mxu0 %v129
    %172 = vmatpush.msra.mxu0 %v128
    %173 = vmatmul.f32.gmra.mxu0 %v134
    %v174 = vpop.f32.mrf.mxu0
    %v175 = vadd.f32 0.0, %v174
    %176 = vmatmul.f32.gmra.mxu0 %v137
    %v177 = vpop.f32.mrf.mxu0
    %v178 = vadd.f32 0.0, %v177
    %179 = vmatmul.f32.gmra.mxu0 %v140
    %v180 = vpop.f32.mrf.mxu0
    %v181 = vadd.f32 0.0, %v180
    %182 = vmatmul.f32.gmra.mxu0 %v143
    %v183 = vpop.f32.mrf.mxu0
    %v184 = vadd.f32 0.0, %v183
    %185 = vmatmul.f32.gmra.mxu0 %v146
    %v186 = vpop.f32.mrf.mxu0
    %v187 = vadd.f32 0.0, %v186
    %188 = vmatmul.f32.gmra.mxu0 %v149
    %v189 = vpop.f32.mrf.mxu0
    %v190 = vadd.f32 0.0, %v189
    %191 = vmatmul.f32.gmra.mxu0 %v152
    %v192 = vpop.f32.mrf.mxu0
    %v193 = vadd.f32 0.0, %v192
    %194 = vmatmul.f32.gmra.mxu0 %v155
    %v195 = vpop.f32.mrf.mxu0
    %v196 = vadd.f32 0.0, %v195
    %197 = vdwg.mxu0
    %v198 = vld [vmem:[#allocation8] sm:$0xff]
    %v199 = vadd.f32 %v175, %v198
    %v200 = vadd.f32 %v178, %v198
    %v201 = vadd.f32 %v181, %v198
    %v202 = vadd.f32 %v184, %v198
    %v203 = vadd.f32 %v187, %v198
    %v204 = vadd.f32 %v190, %v198
    %v205 = vadd.f32 %v193, %v198
    %v206 = vadd.f32 %v196, %v198
    %vm207 = vcmask 785408
    %208 = vst.msk [vmem:[#allocation3] sm:$0xff] %vm207, %v199
    %209 = vst.msk [vmem:[#allocation3 + $0x8] sm:$0xff] %vm207, %v200
    %210 = vst.msk [vmem:[#allocation3 + $0x10] sm:$0xff] %vm207, %v201
    %211 = vst.msk [vmem:[#allocation3 + $0x18] sm:$0xff] %vm207, %v202
    %212 = vst.msk [vmem:[#allocation3 + $0x20] sm:$0xff] %vm207, %v203
    %213 = vst.msk [vmem:[#allocation3 + $0x28] sm:$0xff] %vm207, %v204
    %214 = vst.msk [vmem:[#allocation3 + $0x30] sm:$0xff] %vm207, %v205
    %215 = vst.msk [vmem:[#allocation3 + $0x38] sm:$0xff] %vm207, %v206
    %v216 = vld [vmem:[#allocation11] sm:$0xff]
    %v217 = vld [vmem:[#allocation11 + $0x8] sm:$0xff]
    %v218 = vld [vmem:[#allocation11 + $0x10] sm:$0xff]
    %v219 = vld [vmem:[#allocation11 + $0x18] sm:$0xff]
    %v220 = vld [vmem:[%s4] sm:$0x1]
    %v221 = vld [vmem:[#allocation2] sm:$0xff]
    %v223 = vperm.slane %v220, 0
    %v226 = vsel %vm132, %v221, 0
    %228 = vmatpush.msra.mxu0 0.0
    %229 = vmatpush.msra.mxu0 0.0
    %230 = vmatpush.msra.mxu0 0.0
    %231 = vmatpush.msra.mxu0 0.0
    %232 = vmatpush.msra.mxu0 0.0
    %233 = vmatpush.msra.mxu0 0.0
    %234 = vmatpush.msra.mxu0 0.0
    %235 = vmatpush.msra.mxu0 0.0
    %236 = vmatpush.msra.mxu0 0.0
    %237 = vmatpush.msra.mxu0 0.0
    %238 = vmatpush.msra.mxu0 0.0
    %239 = vmatpush.msra.mxu0 0.0
    %240 = vmatpush.msra.mxu0 %v219
    %241 = vmatpush.msra.mxu0 %v218
    %242 = vmatpush.msra.mxu0 %v217
    %243 = vmatpush.msra.mxu0 %v216
    %244 = vmatmul.f32.gmra.mxu0 %v226
    %v245 = vpop.f32.mrf.mxu0
    %v246 = vadd.f32 %v223, %v245
    %247 = vdwg.mxu0
    %v248 = vld [vmem:[#allocation3] sm:$0xff]
    %v249 = vadd.f32 %v248, %v246
    %v250 = vxor.u32 %v249, 2147483648
    %v251 = vmul.f32 %v250, 1.442695
    %v252 = vpow.pop %v251
    %v253 = vadd.f32 %v252, 1.0
    %v254 = vrcp.pop %v253
    %v255 = vmul.f32 %v253, %v254
    %v256 = vsub.f32 1.0, %v255
    %v257 = vmul.f32 %v254, %v256
    %v258 = vadd.f32 %v254, %v257
    %vm259 = vweird.f32 %v253
    %vm260 = vweird.f32 %v254
    %vm261 = vmor %vm259, %vm260
    %v262 = vsel %vm261, %v254, %v258
    %v263 = vand.u32 2147483647, %v253
    %vm264 = vcmp.eq.f32.partialorder %v263, 8.507059e+37
    %v265 = vand.u32 %v253, 2147483648
    %v266 = vor.u32 1.1754944e-38, %v265
    %v267 = vsel %vm264, %v266, %v262
    %v268 = vmul.f32 1.0, %v267
    %270 = vrot.lane.b32.xlu0 %v246, 64
    %v271 = vpop.permute.xlu0 %270
    %v273 = vmul.f32 %v268, %v271
    %275 = vrot.lane.b32.xlu0 %v273, 64
    %v276 = vpop.permute.xlu0 %275
    %v278 = vadd.f32 %v248, %v276
    %v279 = vtanh.pop %v278
    %v280 = vsub.f32 1.0, %v268
    %282 = vrot.lane.b32.xlu0 %v279, 96
    %v283 = vpop.permute.xlu0 %282
    %v285 = vmul.f32 %v280, %v283
    %286 = vrot.lane.b32.xlu0 %v221, 32
    %v287 = vpop.permute.xlu0 %286
    %v289 = vmul.f32 %v268, %v287
    %v290 = vadd.f32 %v285, %v289
    %292 = vrot.lane.b32.xlu0 %v290, 96
    %v293 = vpop.permute.xlu0 %292
    %295 = vst.msk [vmem:[#allocation4] sm:$0xff] %vm132, %v293
    %v296 = vsel %vm132, %v293, 0
    %298 = vmatpush.msra.mxu0 0.0
    %299 = vmatpush.msra.mxu0 0.0
    %300 = vmatpush.msra.mxu0 0.0
    %301 = vmatpush.msra.mxu0 0.0
    %302 = vmatpush.msra.mxu0 0.0
    %303 = vmatpush.msra.mxu0 0.0
    %304 = vmatpush.msra.mxu0 0.0
    %305 = vmatpush.msra.mxu0 0.0
    %306 = vmatpush.msra.mxu0 0.0
    %307 = vmatpush.msra.mxu0 0.0
    %308 = vmatpush.msra.mxu0 0.0
    %309 = vmatpush.msra.mxu0 0.0
    %310 = vmatpush.msra.mxu0 %v219
    %311 = vmatpush.msra.mxu0 %v218
    %312 = vmatpush.msra.mxu0 %v217
    %313 = vmatpush.msra.mxu0 %v216
    %314 = vmatmul.f32.gmra.mxu0 %v296
    %v315 = vpop.f32.mrf.mxu0
    %v316 = vadd.f32 %v223, %v315
    %317 = vdwg.mxu0
    %s318 = scalar_lea.vmem [#allocation3], 8
    %v319 = vld [vmem:[%s318] sm:$0xff]
    %v320 = vadd.f32 %v319, %v316
    %v321 = vxor.u32 %v320, 2147483648
    %v322 = vmul.f32 %v321, 1.442695
    %v323 = vpow.pop %v322
    %v324 = vadd.f32 %v323, 1.0
    %v325 = vrcp.pop %v324
    %v326 = vmul.f32 %v324, %v325
    %v327 = vsub.f32 1.0, %v326
    %v328 = vmul.f32 %v325, %v327
    %v329 = vadd.f32 %v325, %v328
    %vm330 = vweird.f32 %v324
    %vm331 = vweird.f32 %v325
    %vm332 = vmor %vm330, %vm331
    %v333 = vsel %vm332, %v325, %v329
    %v334 = vand.u32 2147483647, %v324
    %vm335 = vcmp.eq.f32.partialorder %v334, 8.507059e+37
    %v336 = vand.u32 %v324, 2147483648
    %v337 = vor.u32 1.1754944e-38, %v336
    %v338 = vsel %vm335, %v337, %v333
    %v339 = vmul.f32 1.0, %v338
    %341 = vrot.lane.b32.xlu0 %v316, 64
    %v342 = vpop.permute.xlu0 %341
    %v344 = vmul.f32 %v339, %v342
    %346 = vrot.lane.b32.xlu0 %v344, 64
    %v347 = vpop.permute.xlu0 %346
    %v349 = vadd.f32 %v319, %v347
    %v350 = vtanh.pop %v349
    %v351 = vsub.f32 1.0, %v339
    %353 = vrot.lane.b32.xlu0 %v350, 96
    %v354 = vpop.permute.xlu0 %353
    %v356 = vmul.f32 %v351, %v354
    %v357 = vmul.f32 %v339, %v290
    %v358 = vadd.f32 %v356, %v357
    %360 = vrot.lane.b32.xlu0 %v358, 96
    %v361 = vpop.permute.xlu0 %360
    %s363 = scalar_lea.vmem [#allocation4], 8
    %364 = vst.msk [vmem:[%s363] sm:$0xff] %vm132, %v361
    %v365 = vsel %vm132, %v361, 0
    %367 = vmatpush.msra.mxu0 0.0
    %368 = vmatpush.msra.mxu0 0.0
    %369 = vmatpush.msra.mxu0 0.0
    %370 = vmatpush.msra.mxu0 0.0
    %371 = vmatpush.msra.mxu0 0.0
    %372 = vmatpush.msra.mxu0 0.0
    %373 = vmatpush.msra.mxu0 0.0
    %374 = vmatpush.msra.mxu0 0.0
    %375 = vmatpush.msra.mxu0 0.0
    %376 = vmatpush.msra.mxu0 0.0
    %377 = vmatpush.msra.mxu0 0.0
    %378 = vmatpush.msra.mxu0 0.0
    %379 = vmatpush.msra.mxu0 %v219
    %380 = vmatpush.msra.mxu0 %v218
    %381 = vmatpush.msra.mxu0 %v217
    %382 = vmatpush.msra.mxu0 %v216
    %383 = vmatmul.f32.gmra.mxu0 %v365
    %v384 = vpop.f32.mrf.mxu0
    %v385 = vadd.f32 %v223, %v384
    %386 = vdwg.mxu0
    %s387 = scalar_lea.vmem [#allocation3], 16
    %v388 = vld [vmem:[%s387] sm:$0xff]
    %v389 = vadd.f32 %v388, %v385
    %v390 = vxor.u32 %v389, 2147483648
    %v391 = vmul.f32 %v390, 1.442695
    %v392 = vpow.pop %v391
    %v393 = vadd.f32 %v392, 1.0
    %v394 = vrcp.pop %v393
    %v395 = vmul.f32 %v393, %v394
    %v396 = vsub.f32 1.0, %v395
    %v397 = vmul.f32 %v394, %v396
    %v398 = vadd.f32 %v394, %v397
    %vm399 = vweird.f32 %v393
    %vm400 = vweird.f32 %v394
    %vm401 = vmor %vm399, %vm400
    %v402 = vsel %vm401, %v394, %v398
    %v403 = vand.u32 2147483647, %v393
    %vm404 = vcmp.eq.f32.partialorder %v403, 8.507059e+37
    %v405 = vand.u32 %v393, 2147483648
    %v406 = vor.u32 1.1754944e-38, %v405
    %v407 = vsel %vm404, %v406, %v402
    %v408 = vmul.f32 1.0, %v407
    %410 = vrot.lane.b32.xlu0 %v385, 64
    %v411 = vpop.permute.xlu0 %410
    %v413 = vmul.f32 %v408, %v411
    %415 = vrot.lane.b32.xlu0 %v413, 64
    %v416 = vpop.permute.xlu0 %415
    %v418 = vadd.f32 %v388, %v416
    %v419 = vtanh.pop %v418
    %v420 = vsub.f32 1.0, %v408
    %422 = vrot.lane.b32.xlu0 %v419, 96
    %v423 = vpop.permute.xlu0 %422
    %v425 = vmul.f32 %v420, %v423
    %v426 = vmul.f32 %v408, %v358
    %v427 = vadd.f32 %v425, %v426
    %429 = vrot.lane.b32.xlu0 %v427, 96
    %v430 = vpop.permute.xlu0 %429
    %s432 = scalar_lea.vmem [#allocation4], 16
    %433 = vst.msk [vmem:[%s432] sm:$0xff] %vm132, %v430
    %v434 = vsel %vm132, %v430, 0
    %436 = vmatpush.msra.mxu0 0.0
    %437 = vmatpush.msra.mxu0 0.0
    %438 = vmatpush.msra.mxu0 0.0
    %439 = vmatpush.msra.mxu0 0.0
    %440 = vmatpush.msra.mxu0 0.0
    %441 = vmatpush.msra.mxu0 0.0
    %442 = vmatpush.msra.mxu0 0.0
    %443 = vmatpush.msra.mxu0 0.0
    %444 = vmatpush.msra.mxu0 0.0
    %445 = vmatpush.msra.mxu0 0.0
    %446 = vmatpush.msra.mxu0 0.0
    %447 = vmatpush.msra.mxu0 0.0
    %448 = vmatpush.msra.mxu0 %v219
    %449 = vmatpush.msra.mxu0 %v218
    %450 = vmatpush.msra.mxu0 %v217
    %451 = vmatpush.msra.mxu0 %v216
    %452 = vmatmul.f32.gmra.mxu0 %v434
    %v453 = vpop.f32.mrf.mxu0
    %v454 = vadd.f32 %v223, %v453
    %455 = vdwg.mxu0
    %s456 = scalar_lea.vmem [#allocation3], 24
    %v457 = vld [vmem:[%s456] sm:$0xff]
    %v458 = vadd.f32 %v457, %v454
    %v459 = vxor.u32 %v458, 2147483648
    %v460 = vmul.f32 %v459, 1.442695
    %v461 = vpow.pop %v460
    %v462 = vadd.f32 %v461, 1.0
    %v463 = vrcp.pop %v462
    %v464 = vmul.f32 %v462, %v463
    %v465 = vsub.f32 1.0, %v464
    %v466 = vmul.f32 %v463, %v465
    %v467 = vadd.f32 %v463, %v466
    %vm468 = vweird.f32 %v462
    %vm469 = vweird.f32 %v463
    %vm470 = vmor %vm468, %vm469
    %v471 = vsel %vm470, %v463, %v467
    %v472 = vand.u32 2147483647, %v462
    %vm473 = vcmp.eq.f32.partialorder %v472, 8.507059e+37
    %v474 = vand.u32 %v462, 2147483648
    %v475 = vor.u32 1.1754944e-38, %v474
    %v476 = vsel %vm473, %v475, %v471
    %v477 = vmul.f32 1.0, %v476
    %479 = vrot.lane.b32.xlu0 %v454, 64
    %v480 = vpop.permute.xlu0 %479
    %v482 = vmul.f32 %v477, %v480
    %484 = vrot.lane.b32.xlu0 %v482, 64
    %v485 = vpop.permute.xlu0 %484
    %v487 = vadd.f32 %v457, %v485
    %v488 = vtanh.pop %v487
    %v489 = vsub.f32 1.0, %v477
    %491 = vrot.lane.b32.xlu0 %v488, 96
    %v492 = vpop.permute.xlu0 %491
    %v494 = vmul.f32 %v489, %v492
    %v495 = vmul.f32 %v477, %v427
    %v496 = vadd.f32 %v494, %v495
    %498 = vrot.lane.b32.xlu0 %v496, 96
    %v499 = vpop.permute.xlu0 %498
    %s501 = scalar_lea.vmem [#allocation4], 24
    %502 = vst.msk [vmem:[%s501] sm:$0xff] %vm132, %v499
    %v503 = vsel %vm132, %v499, 0
    %505 = vmatpush.msra.mxu0 0.0
    %506 = vmatpush.msra.mxu0 0.0
    %507 = vmatpush.msra.mxu0 0.0
    %508 = vmatpush.msra.mxu0 0.0
    %509 = vmatpush.msra.mxu0 0.0
    %510 = vmatpush.msra.mxu0 0.0
    %511 = vmatpush.msra.mxu0 0.0
    %512 = vmatpush.msra.mxu0 0.0
    %513 = vmatpush.msra.mxu0 0.0
    %514 = vmatpush.msra.mxu0 0.0
    %515 = vmatpush.msra.mxu0 0.0
    %516 = vmatpush.msra.mxu0 0.0
    %517 = vmatpush.msra.mxu0 %v219
    %518 = vmatpush.msra.mxu0 %v218
    %519 = vmatpush.msra.mxu0 %v217
    %520 = vmatpush.msra.mxu0 %v216
    %521 = vmatmul.f32.gmra.mxu0 %v503
    %v522 = vpop.f32.mrf.mxu0
    %v523 = vadd.f32 %v223, %v522
    %524 = vdwg.mxu0
    %s525 = scalar_lea.vmem [#allocation3], 32
    %v526 = vld [vmem:[%s525] sm:$0xff]
    %v527 = vadd.f32 %v526, %v523
    %v528 = vxor.u32 %v527, 2147483648
    %v529 = vmul.f32 %v528, 1.442695
    %v530 = vpow.pop %v529
    %v531 = vadd.f32 %v530, 1.0
    %v532 = vrcp.pop %v531
    %v533 = vmul.f32 %v531, %v532
    %v534 = vsub.f32 1.0, %v533
    %v535 = vmul.f32 %v532, %v534
    %v536 = vadd.f32 %v532, %v535
    %vm537 = vweird.f32 %v531
    %vm538 = vweird.f32 %v532
    %vm539 = vmor %vm537, %vm538
    %v540 = vsel %vm539, %v532, %v536
    %v541 = vand.u32 2147483647, %v531
    %vm542 = vcmp.eq.f32.partialorder %v541, 8.507059e+37
    %v543 = vand.u32 %v531, 2147483648
    %v544 = vor.u32 1.1754944e-38, %v543
    %v545 = vsel %vm542, %v544, %v540
    %v546 = vmul.f32 1.0, %v545
    %548 = vrot.lane.b32.xlu0 %v523, 64
    %v549 = vpop.permute.xlu0 %548
    %v551 = vmul.f32 %v546, %v549
    %553 = vrot.lane.b32.xlu0 %v551, 64
    %v554 = vpop.permute.xlu0 %553
    %v556 = vadd.f32 %v526, %v554
    %v557 = vtanh.pop %v556
    %v558 = vsub.f32 1.0, %v546
    %560 = vrot.lane.b32.xlu0 %v557, 96
    %v561 = vpop.permute.xlu0 %560
    %v563 = vmul.f32 %v558, %v561
    %v564 = vmul.f32 %v546, %v496
    %v565 = vadd.f32 %v563, %v564
    %567 = vrot.lane.b32.xlu0 %v565, 96
    %v568 = vpop.permute.xlu0 %567
    %s570 = scalar_lea.vmem [#allocation4], 32
    %571 = vst.msk [vmem:[%s570] sm:$0xff] %vm132, %v568
    %v572 = vsel %vm132, %v568, 0
    %574 = vmatpush.msra.mxu0 0.0
    %575 = vmatpush.msra.mxu0 0.0
    %576 = vmatpush.msra.mxu0 0.0
    %577 = vmatpush.msra.mxu0 0.0
    %578 = vmatpush.msra.mxu0 0.0
    %579 = vmatpush.msra.mxu0 0.0
    %580 = vmatpush.msra.mxu0 0.0
    %581 = vmatpush.msra.mxu0 0.0
    %582 = vmatpush.msra.mxu0 0.0
    %583 = vmatpush.msra.mxu0 0.0
    %584 = vmatpush.msra.mxu0 0.0
    %585 = vmatpush.msra.mxu0 0.0
    %586 = vmatpush.msra.mxu0 %v219
    %587 = vmatpush.msra.mxu0 %v218
    %588 = vmatpush.msra.mxu0 %v217
    %589 = vmatpush.msra.mxu0 %v216
    %590 = vmatmul.f32.gmra.mxu0 %v572
    %v591 = vpop.f32.mrf.mxu0
    %v592 = vadd.f32 %v223, %v591
    %593 = vdwg.mxu0
    %s594 = scalar_lea.vmem [#allocation3], 40
    %v595 = vld [vmem:[%s594] sm:$0xff]
    %v596 = vadd.f32 %v595, %v592
    %v597 = vxor.u32 %v596, 2147483648
    %v598 = vmul.f32 %v597, 1.442695
    %v599 = vpow.pop %v598
    %v600 = vadd.f32 %v599, 1.0
    %v601 = vrcp.pop %v600
    %v602 = vmul.f32 %v600, %v601
    %v603 = vsub.f32 1.0, %v602
    %v604 = vmul.f32 %v601, %v603
    %v605 = vadd.f32 %v601, %v604
    %vm606 = vweird.f32 %v600
    %vm607 = vweird.f32 %v601
    %vm608 = vmor %vm606, %vm607
    %v609 = vsel %vm608, %v601, %v605
    %v610 = vand.u32 2147483647, %v600
    %vm611 = vcmp.eq.f32.partialorder %v610, 8.507059e+37
    %v612 = vand.u32 %v600, 2147483648
    %v613 = vor.u32 1.1754944e-38, %v612
    %v614 = vsel %vm611, %v613, %v609
    %v615 = vmul.f32 1.0, %v614
    %617 = vrot.lane.b32.xlu0 %v592, 64
    %v618 = vpop.permute.xlu0 %617
    %v620 = vmul.f32 %v615, %v618
    %622 = vrot.lane.b32.xlu0 %v620, 64
    %v623 = vpop.permute.xlu0 %622
    %v625 = vadd.f32 %v595, %v623
    %v626 = vtanh.pop %v625
    %v627 = vsub.f32 1.0, %v615
    %629 = vrot.lane.b32.xlu0 %v626, 96
    %v630 = vpop.permute.xlu0 %629
    %v632 = vmul.f32 %v627, %v630
    %v633 = vmul.f32 %v615, %v565
    %v634 = vadd.f32 %v632, %v633
    %636 = vrot.lane.b32.xlu0 %v634, 96
    %v637 = vpop.permute.xlu0 %636
    %s639 = scalar_lea.vmem [#allocation4], 40
    %640 = vst.msk [vmem:[%s639] sm:$0xff] %vm132, %v637
    %v641 = vsel %vm132, %v637, 0
    %643 = vmatpush.msra.mxu0 0.0
    %644 = vmatpush.msra.mxu0 0.0
    %645 = vmatpush.msra.mxu0 0.0
    %646 = vmatpush.msra.mxu0 0.0
    %647 = vmatpush.msra.mxu0 0.0
    %648 = vmatpush.msra.mxu0 0.0
    %649 = vmatpush.msra.mxu0 0.0
    %650 = vmatpush.msra.mxu0 0.0
    %651 = vmatpush.msra.mxu0 0.0
    %652 = vmatpush.msra.mxu0 0.0
    %653 = vmatpush.msra.mxu0 0.0
    %654 = vmatpush.msra.mxu0 0.0
    %655 = vmatpush.msra.mxu0 %v219
    %656 = vmatpush.msra.mxu0 %v218
    %657 = vmatpush.msra.mxu0 %v217
    %658 = vmatpush.msra.mxu0 %v216
    %659 = vmatmul.f32.gmra.mxu0 %v641
    %v660 = vpop.f32.mrf.mxu0
    %v661 = vadd.f32 %v223, %v660
    %662 = vdwg.mxu0
    %s663 = scalar_lea.vmem [#allocation3], 48
    %v664 = vld [vmem:[%s663] sm:$0xff]
    %v665 = vadd.f32 %v664, %v661
    %v666 = vxor.u32 %v665, 2147483648
    %v667 = vmul.f32 %v666, 1.442695
    %v668 = vpow.pop %v667
    %v669 = vadd.f32 %v668, 1.0
    %v670 = vrcp.pop %v669
    %v671 = vmul.f32 %v669, %v670
    %v672 = vsub.f32 1.0, %v671
    %v673 = vmul.f32 %v670, %v672
    %v674 = vadd.f32 %v670, %v673
    %vm675 = vweird.f32 %v669
    %vm676 = vweird.f32 %v670
    %vm677 = vmor %vm675, %vm676
    %v678 = vsel %vm677, %v670, %v674
    %v679 = vand.u32 2147483647, %v669
    %vm680 = vcmp.eq.f32.partialorder %v679, 8.507059e+37
    %v681 = vand.u32 %v669, 2147483648
    %v682 = vor.u32 1.1754944e-38, %v681
    %v683 = vsel %vm680, %v682, %v678
    %v684 = vmul.f32 1.0, %v683
    %686 = vrot.lane.b32.xlu0 %v661, 64
    %v687 = vpop.permute.xlu0 %686
    %v689 = vmul.f32 %v684, %v687
    %691 = vrot.lane.b32.xlu0 %v689, 64
    %v692 = vpop.permute.xlu0 %691
    %v694 = vadd.f32 %v664, %v692
    %v695 = vtanh.pop %v694
    %v696 = vsub.f32 1.0, %v684
    %698 = vrot.lane.b32.xlu0 %v695, 96
    %v699 = vpop.permute.xlu0 %698
    %v701 = vmul.f32 %v696, %v699
    %v702 = vmul.f32 %v684, %v634
    %v703 = vadd.f32 %v701, %v702
    %705 = vrot.lane.b32.xlu0 %v703, 96
    %v706 = vpop.permute.xlu0 %705
    %s708 = scalar_lea.vmem [#allocation4], 48
    %709 = vst.msk [vmem:[%s708] sm:$0xff] %vm132, %v706
    %v710 = vsel %vm132, %v706, 0
    %712 = vmatpush.msra.mxu0 0.0
    %713 = vmatpush.msra.mxu0 0.0
    %714 = vmatpush.msra.mxu0 0.0
    %715 = vmatpush.msra.mxu0 0.0
    %716 = vmatpush.msra.mxu0 0.0
    %717 = vmatpush.msra.mxu0 0.0
    %718 = vmatpush.msra.mxu0 0.0
    %719 = vmatpush.msra.mxu0 0.0
    %720 = vmatpush.msra.mxu0 0.0
    %721 = vmatpush.msra.mxu0 0.0
    %722 = vmatpush.msra.mxu0 0.0
    %723 = vmatpush.msra.mxu0 0.0
    %724 = vmatpush.msra.mxu0 %v219
    %725 = vmatpush.msra.mxu0 %v218
    %726 = vmatpush.msra.mxu0 %v217
    %727 = vmatpush.msra.mxu0 %v216
    %728 = vmatmul.f32.gmra.mxu0 %v710
    %v729 = vpop.f32.mrf.mxu0
    %v730 = vadd.f32 %v223, %v729
    %731 = vdwg.mxu0
    %s732 = scalar_lea.vmem [#allocation3], 56
    %v733 = vld [vmem:[%s732] sm:$0xff]
    %v734 = vadd.f32 %v733, %v730
    %v735 = vxor.u32 %v734, 2147483648
    %v736 = vmul.f32 %v735, 1.442695
    %v737 = vpow.pop %v736
    %v738 = vadd.f32 %v737, 1.0
    %v739 = vrcp.pop %v738
    %v740 = vmul.f32 %v738, %v739
    %v741 = vsub.f32 1.0, %v740
    %v742 = vmul.f32 %v739, %v741
    %v743 = vadd.f32 %v739, %v742
    %vm744 = vweird.f32 %v738
    %vm745 = vweird.f32 %v739
    %vm746 = vmor %vm744, %vm745
    %v747 = vsel %vm746, %v739, %v743
    %v748 = vand.u32 2147483647, %v738
    %vm749 = vcmp.eq.f32.partialorder %v748, 8.507059e+37
    %v750 = vand.u32 %v738, 2147483648
    %v751 = vor.u32 1.1754944e-38, %v750
    %v752 = vsel %vm749, %v751, %v747
    %v753 = vmul.f32 1.0, %v752
    %755 = vrot.lane.b32.xlu0 %v730, 64
    %v756 = vpop.permute.xlu0 %755
    %v758 = vmul.f32 %v753, %v756
    %760 = vrot.lane.b32.xlu0 %v758, 64
    %v761 = vpop.permute.xlu0 %760
    %v763 = vadd.f32 %v733, %v761
    %v764 = vtanh.pop %v763
    %v765 = vsub.f32 1.0, %v753
    %767 = vrot.lane.b32.xlu0 %v764, 96
    %v768 = vpop.permute.xlu0 %767
    %v770 = vmul.f32 %v765, %v768
    %v771 = vmul.f32 %v753, %v703
    %v772 = vadd.f32 %v770, %v771
    %774 = vrot.lane.b32.xlu0 %v772, 96
    %v775 = vpop.permute.xlu0 %774
    %s777 = scalar_lea.vmem [#allocation4], 56
    %778 = vst.msk [vmem:[%s777] sm:$0xff] %vm132, %v775
    %779 = vst.msk [vmem:[#allocation2] sm:$0xff] %vm132, %v775
    // Predicated region
    $region54: #{tpu_custom_call.1} parent=1 // pred_check
      %p780 = pneg %p106
    $region55: #{tpu_custom_call.1} parent=1 // pred_check_branch
      %782 = sbr.rel (%p780) target = $region57
    $region56: #{tpu_custom_call.1} parent=1 // pred_region
      %783 = vst.msk [vmem:[#allocation15] sm:$0xff] %vm132, %v775
    $region57: #{tpu_custom_call.1} parent=1 // pred_fallthru
      _
    %v784 = vld [vmem:[#allocation4] sm:$0xff]
    %v785 = vld [vmem:[#allocation4 + $0x8] sm:$0xff]
    %v786 = vld [vmem:[#allocation4 + $0x10] sm:$0xff]
    %v787 = vld [vmem:[#allocation4 + $0x18] sm:$0xff]
    %v788 = vld [vmem:[#allocation4 + $0x20] sm:$0xff]
    %v789 = vld [vmem:[#allocation4 + $0x28] sm:$0xff]
    %v790 = vld [vmem:[#allocation4 + $0x30] sm:$0xff]
    %v791 = vld [vmem:[#allocation4 + $0x38] sm:$0xff]
    %v792 = vrot.slane %v786, 4
    %vm793 = vcmask 1047556
    %v794 = vsel %vm793, %v792, %v784
    %v795 = vrot.slane %v784, 4
    %v796 = vsel %vm793, %v786, %v795
    %v798 = vunpack.c.l.s4 1983009808
    %v799 = vunpack.c.0.s8 %v798
    %v800 = vperm.slane %v794, %v799
    %v802 = vunpack.c.l.s4 1983009808
    %v803 = vunpack.c.0.s8 %v802
    %v804 = vperm.slane %v796, %v803
    %v805 = vrot.slane %v787, 4
    %v806 = vsel %vm793, %v805, %v785
    %v807 = vrot.slane %v785, 4
    %v808 = vsel %vm793, %v787, %v807
    %v810 = vunpack.c.l.s4 1983009808
    %v811 = vunpack.c.0.s8 %v810
    %v812 = vperm.slane %v806, %v811
    %v814 = vunpack.c.l.s4 1983009808
    %v815 = vunpack.c.0.s8 %v814
    %v816 = vperm.slane %v808, %v815
    %v817 = vrot.slane %v790, 4
    %v818 = vsel %vm793, %v817, %v788
    %v819 = vrot.slane %v788, 4
    %v820 = vsel %vm793, %v790, %v819
    %v822 = vunpack.c.l.s4 1983009808
    %v823 = vunpack.c.0.s8 %v822
    %v824 = vperm.slane %v818, %v823
    %v826 = vunpack.c.l.s4 1983009808
    %v827 = vunpack.c.0.s8 %v826
    %v828 = vperm.slane %v820, %v827
    %v829 = vrot.slane %v791, 4
    %v830 = vsel %vm793, %v829, %v789
    %v831 = vrot.slane %v789, 4
    %v832 = vsel %vm793, %v791, %v831
    %v834 = vunpack.c.l.s4 1983009808
    %v835 = vunpack.c.0.s8 %v834
    %v836 = vperm.slane %v830, %v835
    %v838 = vunpack.c.l.s4 1983009808
    %v839 = vunpack.c.0.s8 %v838
    %v840 = vperm.slane %v832, %v839
    %v841 = vrot.slane %v812, 4
    %v842 = vsel %vm793, %v841, %v800
    %v843 = vrot.slane %v800, 4
    %v844 = vsel %vm793, %v812, %v843
    %v846 = vunpack.c.l.s4 1934713408
    %v847 = vunpack.c.0.s8 %v846
    %v848 = vperm.slane %v842, %v847
    %v850 = vunpack.c.l.s4 1934713408
    %v851 = vunpack.c.0.s8 %v850
    %v852 = vperm.slane %v844, %v851
    %v853 = vrot.slane %v816, 4
    %v854 = vsel %vm793, %v853, %v804
    %v855 = vrot.slane %v804, 4
    %v856 = vsel %vm793, %v816, %v855
    %v858 = vunpack.c.l.s4 1934713408
    %v859 = vunpack.c.0.s8 %v858
    %v860 = vperm.slane %v854, %v859
    %v862 = vunpack.c.l.s4 1934713408
    %v863 = vunpack.c.0.s8 %v862
    %v864 = vperm.slane %v856, %v863
    %v865 = vrot.slane %v836, 4
    %v866 = vsel %vm793, %v865, %v824
    %v867 = vrot.slane %v824, 4
    %v868 = vsel %vm793, %v836, %v867
    %v870 = vunpack.c.l.s4 1934713408
    %v871 = vunpack.c.0.s8 %v870
    %v872 = vperm.slane %v866, %v871
    %v874 = vunpack.c.l.s4 1934713408
    %v875 = vunpack.c.0.s8 %v874
    %v876 = vperm.slane %v868, %v875
    %v877 = vrot.slane %v840, 4
    %v878 = vsel %vm793, %v877, %v828
    %v879 = vrot.slane %v828, 4
    %v880 = vsel %vm793, %v840, %v879
    %v882 = vunpack.c.l.s4 1934713408
    %v883 = vunpack.c.0.s8 %v882
    %v884 = vperm.slane %v878, %v883
    %v886 = vunpack.c.l.s4 1934713408
    %v887 = vunpack.c.0.s8 %v886
    %v888 = vperm.slane %v880, %v887
    %v889 = vrot.slane %v872, 4
    %v890 = vsel %vm793, %v889, %v848
    %v891 = vrot.slane %v848, 4
    %v892 = vsel %vm793, %v872, %v891
    %v893 = vrot.slane %v876, 4
    %v894 = vsel %vm793, %v893, %v852
    %v895 = vrot.slane %v852, 4
    %v896 = vsel %vm793, %v876, %v895
    %v897 = vrot.slane %v884, 4
    %v898 = vsel %vm793, %v897, %v860
    %v899 = vrot.slane %v860, 4
    %v900 = vsel %vm793, %v884, %v899
    %v901 = vrot.slane %v888, 4
    %v902 = vsel %vm793, %v901, %v864
    %v903 = vrot.slane %v864, 4
    %v904 = vsel %vm793, %v888, %v903
    %v905 = vld [vmem:[#allocation13] sm:$0xff]
    %v906 = vld [vmem:[#allocation13 + $0x8] sm:$0xff]
    %v907 = vld [vmem:[#allocation13 + $0x10] sm:$0xff]
    %v908 = vld [vmem:[#allocation13 + $0x18] sm:$0xff]
    %v909 = vld [vmem:[%s6] sm:$0x1]
    %v911 = vperm.slane %v909, 0
    %v914 = vsel %vm132, %v890, 0
    %v917 = vsel %vm132, %v892, 0
    %v920 = vsel %vm132, %v894, 0
    %v923 = vsel %vm132, %v896, 0
    %v926 = vsel %vm132, %v898, 0
    %v929 = vsel %vm132, %v900, 0
    %v932 = vsel %vm132, %v902, 0
    %v935 = vsel %vm132, %v904, 0
    %937 = vmatpush.msra.mxu0 0.0
    %938 = vmatpush.msra.mxu0 0.0
    %939 = vmatpush.msra.mxu0 0.0
    %940 = vmatpush.msra.mxu0 0.0
    %941 = vmatpush.msra.mxu0 0.0
    %942 = vmatpush.msra.mxu0 0.0
    %943 = vmatpush.msra.mxu0 0.0
    %944 = vmatpush.msra.mxu0 0.0
    %945 = vmatpush.msra.mxu0 0.0
    %946 = vmatpush.msra.mxu0 0.0
    %947 = vmatpush.msra.mxu0 0.0
    %948 = vmatpush.msra.mxu0 0.0
    %949 = vmatpush.msra.mxu0 %v908
    %950 = vmatpush.msra.mxu0 %v907
    %951 = vmatpush.msra.mxu0 %v906
    %952 = vmatpush.msra.mxu0 %v905
    %953 = vmatmul.f32.gmra.mxu0 %v914
    %v954 = vpop.f32.mrf.mxu0
    %v955 = vadd.f32 %v911, %v954
    %956 = vmatmul.f32.gmra.mxu0 %v917
    %v957 = vpop.f32.mrf.mxu0
    %v958 = vadd.f32 %v911, %v957
    %959 = vmatmul.f32.gmra.mxu0 %v920
    %v960 = vpop.f32.mrf.mxu0
    %v961 = vadd.f32 %v911, %v960
    %962 = vmatmul.f32.gmra.mxu0 %v923
    %v963 = vpop.f32.mrf.mxu0
    %v964 = vadd.f32 %v911, %v963
    %965 = vmatmul.f32.gmra.mxu0 %v926
    %v966 = vpop.f32.mrf.mxu0
    %v967 = vadd.f32 %v911, %v966
    %968 = vmatmul.f32.gmra.mxu0 %v929
    %v969 = vpop.f32.mrf.mxu0
    %v970 = vadd.f32 %v911, %v969
    %971 = vmatmul.f32.gmra.mxu0 %v932
    %v972 = vpop.f32.mrf.mxu0
    %v973 = vadd.f32 %v911, %v972
    %974 = vmatmul.f32.gmra.mxu0 %v935
    %v975 = vpop.f32.mrf.mxu0
    %v976 = vadd.f32 %v911, %v975
    %977 = vdwg.mxu0
    %v978 = vlaneseq
    %v979 = vand.u32 %v978, 127
    %vm980 = vcmp.lt.s32.totalorder %v979, 64
    %v981 = vsel %vm980, %v955, -1e+30
    %v982 = vsel %vm980, %v958, -1e+30
    %v983 = vsel %vm980, %v961, -1e+30
    %v984 = vsel %vm980, %v964, -1e+30
    %v985 = vsel %vm980, %v967, -1e+30
    %v986 = vsel %vm980, %v970, -1e+30
    %v987 = vsel %vm980, %v973, -1e+30
    %v988 = vsel %vm980, %v976, -1e+30
    %989 = vst [vmem:[#allocation14] sm:$0xff] %v981
    %990 = vst [vmem:[#allocation14 + $0x8] sm:$0xff] %v982
    %991 = vst [vmem:[#allocation14 + $0x10] sm:$0xff] %v983
    %992 = vst [vmem:[#allocation14 + $0x18] sm:$0xff] %v984
    %993 = vst [vmem:[#allocation14 + $0x20] sm:$0xff] %v985
    %994 = vst [vmem:[#allocation14 + $0x28] sm:$0xff] %v986
    %995 = vst [vmem:[#allocation14 + $0x30] sm:$0xff] %v987
    %996 = vst [vmem:[#allocation14 + $0x38] sm:$0xff] %v988
    %997 = vmax.xlane.f32.xlu0 %v981
    %v998 = vpop.xlane.xlu0 %997
    %999 = vmax.xlane.f32.xlu0 %v982
    %v1000 = vpop.xlane.xlu0 %999
    %1001 = vmax.xlane.f32.xlu0 %v983
    %v1002 = vpop.xlane.xlu0 %1001
    %1003 = vmax.xlane.f32.xlu0 %v984
    %v1004 = vpop.xlane.xlu0 %1003
    %1005 = vmax.xlane.f32.xlu0 %v985
    %v1006 = vpop.xlane.xlu0 %1005
    %1007 = vmax.xlane.f32.xlu0 %v986
    %v1008 = vpop.xlane.xlu0 %1007
    %1009 = vmax.xlane.f32.xlu0 %v987
    %v1010 = vpop.xlane.xlu0 %1009
    %1011 = vmax.xlane.f32.xlu0 %v988
    %v1012 = vpop.xlane.xlu0 %1011
    %v1013 = vmax.f32 %v998, -1e+30
    %v1014 = vmax.f32 %v1000, -1e+30
    %v1015 = vmax.f32 %v1002, -1e+30
    %v1016 = vmax.f32 %v1004, -1e+30
    %v1017 = vmax.f32 %v1006, -1e+30
    %v1018 = vmax.f32 %v1008, -1e+30
    %v1019 = vmax.f32 %v1010, -1e+30
    %v1020 = vmax.f32 %v1012, -1e+30
    %v1021 = vsub.f32 -1e+30, %v1013
    %v1022 = vsub.f32 -1e+30, %v1014
    %v1023 = vsub.f32 -1e+30, %v1015
    %v1024 = vsub.f32 -1e+30, %v1016
    %v1025 = vsub.f32 -1e+30, %v1017
    %v1026 = vsub.f32 -1e+30, %v1018
    %v1027 = vsub.f32 -1e+30, %v1019
    %v1028 = vsub.f32 -1e+30, %v1020
    %v1029 = vmul.f32 %v1021, 1.442695
    %v1030 = vpow.pop %v1029
    %v1031 = vmul.f32 %v1022, 1.442695
    %v1032 = vpow.pop %v1031
    %v1033 = vmul.f32 %v1023, 1.442695
    %v1034 = vpow.pop %v1033
    %v1035 = vmul.f32 %v1024, 1.442695
    %v1036 = vpow.pop %v1035
    %v1037 = vmul.f32 %v1025, 1.442695
    %v1038 = vpow.pop %v1037
    %v1039 = vmul.f32 %v1026, 1.442695
    %v1040 = vpow.pop %v1039
    %v1041 = vmul.f32 %v1027, 1.442695
    %v1042 = vpow.pop %v1041
    %v1043 = vmul.f32 %v1028, 1.442695
    %v1044 = vpow.pop %v1043
    %v1045 = vmul.f32 %v1030, 0.0
    %v1046 = vmul.f32 %v1032, 0.0
    %v1047 = vmul.f32 %v1034, 0.0
    %v1048 = vmul.f32 %v1036, 0.0
    %v1049 = vmul.f32 %v1038, 0.0
    %v1050 = vmul.f32 %v1040, 0.0
    %v1051 = vmul.f32 %v1042, 0.0
    %v1052 = vmul.f32 %v1044, 0.0
    %v1053 = vsub.f32 %v981, %v1013
    %v1054 = vsub.f32 %v982, %v1014
    %v1055 = vsub.f32 %v983, %v1015
    %v1056 = vsub.f32 %v984, %v1016
    %v1057 = vsub.f32 %v985, %v1017
    %v1058 = vsub.f32 %v986, %v1018
    %v1059 = vsub.f32 %v987, %v1019
    %v1060 = vsub.f32 %v988, %v1020
    %v1061 = vmul.f32 %v1053, 1.442695
    %v1062 = vpow.pop %v1061
    %v1063 = vmul.f32 %v1054, 1.442695
    %v1064 = vpow.pop %v1063
    %v1065 = vmul.f32 %v1055, 1.442695
    %v1066 = vpow.pop %v1065
    %v1067 = vmul.f32 %v1056, 1.442695
    %v1068 = vpow.pop %v1067
    %v1069 = vmul.f32 %v1057, 1.442695
    %v1070 = vpow.pop %v1069
    %v1071 = vmul.f32 %v1058, 1.442695
    %v1072 = vpow.pop %v1071
    %v1073 = vmul.f32 %v1059, 1.442695
    %v1074 = vpow.pop %v1073
    %v1075 = vmul.f32 %v1060, 1.442695
    %v1076 = vpow.pop %v1075
    %1077 = vadd.xlane.f32.xlu0 %v1062
    %v1078 = vpop.xlane.xlu0 %1077
    %1079 = vadd.xlane.f32.xlu0 %v1064
    %v1080 = vpop.xlane.xlu0 %1079
    %1081 = vadd.xlane.f32.xlu0 %v1066
    %v1082 = vpop.xlane.xlu0 %1081
    %1083 = vadd.xlane.f32.xlu0 %v1068
    %v1084 = vpop.xlane.xlu0 %1083
    %1085 = vadd.xlane.f32.xlu0 %v1070
    %v1086 = vpop.xlane.xlu0 %1085
    %1087 = vadd.xlane.f32.xlu0 %v1072
    %v1088 = vpop.xlane.xlu0 %1087
    %1089 = vadd.xlane.f32.xlu0 %v1074
    %v1090 = vpop.xlane.xlu0 %1089
    %1091 = vadd.xlane.f32.xlu0 %v1076
    %v1092 = vpop.xlane.xlu0 %1091
    %v1093 = vadd.f32 %v1045, %v1078
    %v1094 = vadd.f32 %v1046, %v1080
    %v1095 = vadd.f32 %v1047, %v1082
    %v1096 = vadd.f32 %v1048, %v1084
    %v1097 = vadd.f32 %v1049, %v1086
    %v1098 = vadd.f32 %v1050, %v1088
    %v1099 = vadd.f32 %v1051, %v1090
    %v1100 = vadd.f32 %v1052, %v1092
    %v1101 = vlog2.pop %v1093
    %v1102 = vmul.f32 %v1101, 0.6931472
    %v1103 = vlog2.pop %v1094
    %v1104 = vmul.f32 %v1103, 0.6931472
    %v1105 = vlog2.pop %v1095
    %v1106 = vmul.f32 %v1105, 0.6931472
    %v1107 = vlog2.pop %v1096
    %v1108 = vmul.f32 %v1107, 0.6931472
    %v1109 = vlog2.pop %v1097
    %v1110 = vmul.f32 %v1109, 0.6931472
    %v1111 = vlog2.pop %v1098
    %v1112 = vmul.f32 %v1111, 0.6931472
    %v1113 = vlog2.pop %v1099
    %v1114 = vmul.f32 %v1113, 0.6931472
    %v1115 = vlog2.pop %v1100
    %v1116 = vmul.f32 %v1115, 0.6931472
    %v1117 = vadd.f32 %v1013, %v1102
    %v1118 = vadd.f32 %v1014, %v1104
    %v1119 = vadd.f32 %v1015, %v1106
    %v1120 = vadd.f32 %v1016, %v1108
    %v1121 = vadd.f32 %v1017, %v1110
    %v1122 = vadd.f32 %v1018, %v1112
    %v1123 = vadd.f32 %v1019, %v1114
    %v1124 = vadd.f32 %v1020, %v1116
    %v1125 = vld [vmem:[#allocation14] sm:$0xff]
    %v1126 = vld [vmem:[#allocation14 + $0x8] sm:$0xff]
    %v1127 = vld [vmem:[#allocation14 + $0x10] sm:$0xff]
    %v1128 = vld [vmem:[#allocation14 + $0x18] sm:$0xff]
    %v1129 = vld [vmem:[#allocation14 + $0x20] sm:$0xff]
    %v1130 = vld [vmem:[#allocation14 + $0x28] sm:$0xff]
    %v1131 = vld [vmem:[#allocation14 + $0x30] sm:$0xff]
    %v1132 = vld [vmem:[#allocation14 + $0x38] sm:$0xff]
    %v1133 = vsub.f32 %v1125, %v1117
    %v1134 = vsub.f32 %v1126, %v1118
    %v1135 = vsub.f32 %v1127, %v1119
    %v1136 = vsub.f32 %v1128, %v1120
    %v1137 = vsub.f32 %v1129, %v1121
    %v1138 = vsub.f32 %v1130, %v1122
    %v1139 = vsub.f32 %v1131, %v1123
    %v1140 = vsub.f32 %v1132, %v1124
    %1141 = vst [vmem:[#allocation14] sm:$0xff] %v1133
    %1142 = vst [vmem:[#allocation14 + $0x8] sm:$0xff] %v1134
    %1143 = vst [vmem:[#allocation14 + $0x10] sm:$0xff] %v1135
    %1144 = vst [vmem:[#allocation14 + $0x18] sm:$0xff] %v1136
    %1145 = vst [vmem:[#allocation14 + $0x20] sm:$0xff] %v1137
    %1146 = vst [vmem:[#allocation14 + $0x28] sm:$0xff] %v1138
    %1147 = vst [vmem:[#allocation14 + $0x30] sm:$0xff] %v1139
    %1148 = vst [vmem:[#allocation14 + $0x38] sm:$0xff] %v1140
    // Predicated region
    $region58: #{tpu_custom_call.1} parent=1 // pred_check
      _
    $region59: #{tpu_custom_call.1} parent=1 // pred_check_branch
      %1150 = sbr.rel (0) target = $region61
    $region60: #{tpu_custom_call.1} parent=1 // pred_region
      %1152 = vsyncadd [#allocation7], 0
      %s1153 = sshll.u32 [#allocation14], 4
      %s1154 = int_to_ptr.vmem [resolvable:$true] %s1153
      %s1155 = sshll.u32 %s7, 4
      %s1156 = int_to_ptr.hbm [resolvable:$true] %s1155
      %1161 = dma.vmem_to_hbm [thread:$0]  %s1154, 1024, %s1156, [#allocation7], 128, 128, 8
    $region61: #{tpu_custom_call.1} parent=1 // pred_fallthru
      _
    // Predicated region
    $region62: #{tpu_custom_call.1} parent=1 // pred_check
      _
    $region63: #{tpu_custom_call.1} parent=1 // pred_check_branch
      %1163 = sbr.rel (0) target = $region65
    $region64: #{tpu_custom_call.1} parent=1 // pred_region
      %1165 = vsyncadd [#allocation16], 0
      %s1167 = sshll.u32 [#allocation15], 4
      %s1168 = int_to_ptr.vmem [resolvable:$true] %s1167
      %s1169 = sshll.u32 %s8, 4
      %s1170 = int_to_ptr.hbm [resolvable:$true] %s1169
      %1172 = dma.vmem_to_hbm [thread:$0]  %s1168, 128, %s1170, [#allocation16]
    $region65: #{tpu_custom_call.1} parent=1 // pred_fallthru
      _
    // Predicated region
    $region66: #{tpu_custom_call.1} parent=1 // pred_check
      _
    $region67: #{tpu_custom_call.1} parent=1 // pred_check_branch
      %1174 = sbr.rel (0) target = $region69
    $region68: #{tpu_custom_call.1} parent=1 // pred_region
      %1176 = dma.done [#allocation7], 1024
    $region69: #{tpu_custom_call.1} parent=1 // pred_fallthru
      _
    // Predicated region
    $region70: #{tpu_custom_call.1} parent=1 // pred_check
      _
    $region71: #{tpu_custom_call.1} parent=1 // pred_check_branch
      %1178 = sbr.rel (0) target = $region73
    $region72: #{tpu_custom_call.1} parent=1 // pred_region
      %1180 = dma.done [#allocation16], 128
    $region73: #{tpu_custom_call.1} parent=1 // pred_fallthru
      _
    %1181 = vsyncpa [#allocation6], 1
    %1182 = vsyncpa [#allocation9], 1
    %1183 = vsyncpa [#allocation12], 1
    %1184 = vsyncpa [#allocation7], 1
    %1185 = vsyncpa [#allocation16], 1

</llo_original>
